<compile_context>
chip_gen: v5e
topology: v5e:2x2
jax: 0.10.0
libtpu: 0.0.40
codegen_flags: <defaults>
</compile_context>

<pallas_src>
import math
import jax
import jax.numpy as jnp
from jax.experimental import pallas as pl
from jax.experimental.pallas import tpu as pltpu

# --- problem sizes (small, consistent with the module's __init__) ---
B, S, D = 2, 16, 32        # batch, seq_len, d_model
K_PROJ = 8                 # Linformer projected length k
D_FF = 64                  # feed-forward hidden
HEADS = 4
DK = D // HEADS
EPS = 1e-5                 # nn.LayerNorm default eps

BS = B * S                 # 32 tokens total
BK = B * K_PROJ            # 16 projected positions total

SEG = 128                  # 128-lane segment width for slab packing

# ---- weight-slab column offsets (all 128-aligned) ----
W_QKV_OFF = 0 * SEG        # (D, 3D)   fused Q|K|V (Q pre-scaled by 1/sqrt(DK))
WO_OFF    = 1 * SEG        # (D, D)    output projection
W1_OFF    = 2 * SEG        # (D, D_FF) FF layer1
W2T_OFF   = 3 * SEG        # (D, D_FF) FF layer2 weight, stored transposed
EF_OFF    = 4 * SEG        # rows 0:BK = kron(I_B, E), rows BK:2BK = kron(I_B, F)
MASK_OFF  = 5 * SEG        # (BS, BK)  cross-batch additive mask (0 / -1e30)
W_COLS    = 6 * SEG

# ---- bias-slab column offsets (all 128-aligned, single row) ----
G1_OFF   = 0 * SEG
BE1_OFF  = 1 * SEG
BQKV_OFF = 2 * SEG         # (1, 3D)   fused bq|bk|bv (bq pre-scaled)
BO_OFF   = 3 * SEG
G2_OFF   = 4 * SEG
BE2_OFF  = 5 * SEG
B1_OFF   = 6 * SEG
B2_OFF   = 7 * SEG
B_COLS   = 8 * SEG


def _erf(x):
    # Abramowitz & Stegun 7.1.26 rational approximation (|err| < 1.5e-7), built only
    # from ops guaranteed to lower on the TPU VPU/EUP (mul/add/exp/abs/select).
    a1, a2, a3, a4, a5 = 0.254829592, -0.284496736, 1.421413741, -1.453152027, 1.061405429
    p = 0.3275911
    ax = jnp.abs(x)
    d = 1.0 + p * ax
    # EUP approximate reciprocal + one Newton-Raphson refinement (error ~1e-7 rel,
    # negligible even after the ~16x polynomial amplification).
    r = pl.reciprocal(d, approx=True)
    t = r * (2.0 - d * r)
    poly = t * (a1 + t * (a2 + t * (a3 + t * (a4 + t * a5))))
    r_out = 1.0 - poly * jnp.exp(-ax * ax)
    return jnp.where(x >= 0.0, r_out, -r_out)


def _gelu_exact(x):
    # F.gelu default (approximate='none'): 0.5 * x * (1 + erf(x / sqrt(2)))
    return 0.5 * x * (1.0 + _erf(x * (1.0 / math.sqrt(2.0))))


def _layer_norm(x, gamma, beta):
    mu = jnp.mean(x, axis=-1, keepdims=True)
    var = jnp.mean((x - mu) ** 2, axis=-1, keepdims=True)   # biased, as in nn.LayerNorm
    return (x - mu) * jax.lax.rsqrt(var + EPS) * gamma + beta


def encoder_block_kernel(x_ref, w_ref, b_ref, o_ref):
    x = x_ref[...]                                   # (B*S, D) all tokens, one grid step
    res1 = x

    # ---- 128-aligned static slices of the packed slabs (resident in VMEM) ----
    g1    = b_ref[:, G1_OFF:G1_OFF + D]
    be1   = b_ref[:, BE1_OFF:BE1_OFF + D]
    b_qkv = b_ref[:, BQKV_OFF:BQKV_OFF + 3 * D]       # (1, 3D), bq pre-scaled
    bo    = b_ref[:, BO_OFF:BO_OFF + D]
    g2    = b_ref[:, G2_OFF:G2_OFF + D]
    be2   = b_ref[:, BE2_OFF:BE2_OFF + D]
    b1    = b_ref[:, B1_OFF:B1_OFF + D_FF]
    b2    = b_ref[:, B2_OFF:B2_OFF + D]

    w_qkv = w_ref[:, W_QKV_OFF:W_QKV_OFF + 3 * D]     # (D, 3D), wq pre-scaled
    wo    = w_ref[:, WO_OFF:WO_OFF + D]               # (D, D)
    w1    = w_ref[:, W1_OFF:W1_OFF + D_FF]            # (D, D_FF)
    w2t   = w_ref[:, W2T_OFF:W2T_OFF + D_FF]          # (D, D_FF) = W2^T
    e_blk = w_ref[0:BK, EF_OFF:EF_OFF + BS]           # (B*K, B*S) block-diag E
    f_blk = w_ref[BK:2 * BK, EF_OFF:EF_OFF + BS]      # (B*K, B*S) block-diag F
    mask  = w_ref[:, MASK_OFF:MASK_OFF + BK]          # (B*S, B*K) 0 / -1e30

    # ---- norm1 ----
    xn = _layer_norm(x, g1, be1)

    # ---- Linformer multi-head self-attention ----
    # fused QKV: one MXU push instead of three (Q already carries the 1/sqrt(dk) scale).
    qkv = jnp.dot(xn, w_qkv, preferred_element_type=jnp.float32) + b_qkv   # (B*S, 3D)
    q = qkv[:, 0:D]
    k = qkv[:, D:2 * D]
    v = qkv[:, 2 * D:3 * D]

    # block-diagonal E/F: both batches projected in one matmul each, head-shared.
    kp = jnp.dot(e_blk, k, preferred_element_type=jnp.float32)   # (B*K, D)
    vp = jnp.dot(f_blk, v, preferred_element_type=jnp.float32)   # (B*K, D)

    # per-head accumulation: acc += (attn_h @ v_h) @ Wo[h*DK:(h+1)*DK, :]
    # (8-row sublane slices of Wo = one f32 sublane tile; no lane concat / XLU shuffles).
    attn_acc = res1 + bo                              # residual + output bias folded in
    for h in range(HEADS):                            # statically unrolled, 4 heads
        lo = h * DK
        qh  = q[:, lo:lo + DK]                        # (B*S, DK)
        kph = kp[:, lo:lo + DK]                       # (B*K, DK)
        vph = vp[:, lo:lo + DK]                       # (B*K, DK)
        scores = jax.lax.dot_general(                 # q @ kp^T -> (B*S, B*K)
            qh, kph, (((1,), (1,)), ((), ())),
            preferred_element_type=jnp.float32) + mask
        scores = scores - jnp.max(scores, axis=-1, keepdims=True)
        pexp = jnp.exp(scores)                        # masked entries underflow to 0
        inv_l = pl.reciprocal(jnp.sum(pexp, axis=-1, keepdims=True), approx=True)
        oh = jnp.dot(pexp * inv_l, vph, preferred_element_type=jnp.float32)   # (B*S, DK)
        attn_acc = attn_acc + jnp.dot(oh, wo[lo:lo + DK, :],
                                      preferred_element_type=jnp.float32)
    # attention dropout: identity (eval mode)

    x2 = attn_acc
    res2 = x2

    # ---- norm2 + FeedForward ----
    xn2 = _layer_norm(x2, g2, be2)
    hdn = jnp.dot(xn2, w1, preferred_element_type=jnp.float32) + b1
    hdn = _gelu_exact(hdn)
    # second FF matmul against the transposed-stored W2 (contract on dim 1 of both).
    ff = jax.lax.dot_general(hdn, w2t, (((1,), (1,)), ((), ())),
                             preferred_element_type=jnp.float32) + b2
    # FF dropout: identity (eval mode)

    o_ref[...] = ff + res2


def pack_params(params):
    """One-time host-side packing (call at parameter-init time, NOT per forward)."""
    (g1, be1, wq, bq, wk, bk_, wv, bv, e, f, wo, bo, g2, be2, w1, b1, w2, b2) = params

    def pad_cols(a, width=SEG):
        return jnp.pad(a, ((0, 0), (0, width - a.shape[1])))

    # fold the 1/sqrt(dk) softmax scale into the Q projection (exact rewrite).
    scale = 1.0 / math.sqrt(DK)
    w_qkv = jnp.concatenate([wq * scale, wk, wv], axis=1)         # (D, 3D)
    b_qkv = jnp.concatenate([bq * scale, bk_, bv], axis=1)        # (1, 3D)

    # block-diagonal E/F: projects both batches in one matmul each inside the kernel.
    eye = jnp.eye(B, dtype=e.dtype)
    ef = jnp.concatenate([jnp.kron(eye, e), jnp.kron(eye, f)], axis=0)   # (2*B*K, B*S)

    # compile-time-static cross-batch additive mask (BS, BK): 0 inside batch, -1e30 across.
    row_b = jnp.arange(BS)[:, None] // S
    col_b = jnp.arange(BK)[None, :] // K_PROJ
    mask = jnp.where(row_b == col_b, 0.0, -1e30).astype(jnp.float32)     # (B*S, B*K)

    w_slab = jnp.concatenate(
        [pad_cols(w_qkv), pad_cols(wo), pad_cols(w1),
         pad_cols(w2.T), pad_cols(ef), pad_cols(mask)], axis=1)          # (32, 768)
    b_slab = jnp.concatenate(
        [pad_cols(g1), pad_cols(be1), pad_cols(b_qkv), pad_cols(bo),
         pad_cols(g2), pad_cols(be2), pad_cols(b1), pad_cols(b2)], axis=1)  # (1, 1024)

    assert w_slab.shape == (BS, W_COLS) and b_slab.shape == (1, B_COLS)
    return jax.block_until_ready((w_slab, b_slab))


def encoder_block(x, packed):
    w_slab, b_slab = packed
    x2d = x.reshape(BS, D)                                        # fold batch into rows

    full = lambda a: pl.BlockSpec(a.shape, lambda i: (0,) * a.ndim)
    out = pl.pallas_call(
        encoder_block_kernel,
        out_shape=jax.ShapeDtypeStruct((BS, D), jnp.float32),
        grid=(1,),                                                # single step: whole problem
        in_specs=[full(x2d), full(w_slab), full(b_slab)],
        out_specs=pl.BlockSpec((BS, D), lambda i: (0, 0)),
        compiler_params=pltpu.CompilerParams(dimension_semantics=("arbitrary",)),
    )(x2d, w_slab, b_slab)
    return out.reshape(B, S, D)


# ---- pure-JAX reference (same math, exact erf) for a sanity check ----
def reference(x, params):
    (g1, be1, wq, bq, wk, bk_, wv, bv, e, f, wo, bo, g2, be2, w1, b1, w2, b2) = params

    def ln(t, g, b):
        mu = jnp.mean(t, -1, keepdims=True)
        var = jnp.mean((t - mu) ** 2, -1, keepdims=True)
        return (t - mu) / jnp.sqrt(var + EPS) * g + b

    res1 = x
    xn = ln(x, g1, be1)
    q = xn @ wq + bq
    k = xn @ wk + bk_
    v = xn @ wv + bv
    qh = q.reshape(B, S, HEADS, DK).transpose(0, 2, 1, 3)
    kh = k.reshape(B, S, HEADS, DK).transpose(0, 2, 1, 3)
    vh = v.reshape(B, S, HEADS, DK).transpose(0, 2, 1, 3)
    kp = jnp.einsum("ks,bhsd->bhkd", e, kh)
    vp = jnp.einsum("ks,bhsd->bhkd", f, vh)
    scores = jnp.einsum("bhqd,bhkd->bhqk", qh, kp) / math.sqrt(DK)
    attn = jax.nn.softmax(scores, axis=-1)
    out = jnp.einsum("bhqk,bhkd->bhqd", attn, vp).transpose(0, 2, 1, 3).reshape(B, S, D)
    x2 = out @ wo + bo + res1
    res2 = x2
    xn2 = ln(x2, g2, be2)
    h = xn2 @ w1 + b1
    h = 0.5 * h * (1.0 + jax.scipy.special.erf(h / math.sqrt(2.0)))
    return h @ w2 + b2 + res2


if __name__ == "__main__":
    key = jax.random.PRNGKey(0)
    ks = jax.random.split(key, 16)

    def init(k, shape, scale=0.05):
        return scale * jax.random.normal(k, shape, jnp.float32)

    x = jax.random.normal(ks[0], (B, S, D), jnp.float32)

    params = [
        jnp.ones((1, D), jnp.float32),   # norm1 gamma
        jnp.zeros((1, D), jnp.float32),  # norm1 beta
        init(ks[1], (D, D)), init(ks[2], (1, D)),    # Wq, bq
        init(ks[3], (D, D)), init(ks[4], (1, D)),    # Wk, bk
        init(ks[5], (D, D)), init(ks[6], (1, D)),    # Wv, bv
        init(ks[7], (K_PROJ, S)),                    # E  (seq_len -> k, head-shared)
        init(ks[8], (K_PROJ, S)),                    # F  (value projection)
        init(ks[9], (D, D)), init(ks[10], (1, D)),   # Wo, bo
        jnp.ones((1, D), jnp.float32),   # norm2 gamma
        jnp.zeros((1, D), jnp.float32),  # norm2 beta
        init(ks[11], (D, D_FF)), init(ks[12], (1, D_FF)),  # FF layer1
        init(ks[13], (D_FF, D)), init(ks[14], (1, D)),     # FF layer2
    ]

    # one-time packing (hoisted out of the per-call path)
    packed = pack_params(params)

    out = encoder_block(x, packed)
    jax.block_until_ready(out)

    ref = reference(x, params)
    assert out.shape == (B, S, D)
    assert jnp.allclose(out, ref, atol=2e-3, rtol=2e-3), float(jnp.max(jnp.abs(out - ref)))

    print("KERNEL_OK")
</pallas_src>

<mosaic_0001>
module attributes {stable_mosaic.version = 11 : i64} {
  func.func @encoder_block_kernel(%arg0: i32, %arg1: memref<32x32xf32, #tpu.memory_space<vmem>>, %arg2: memref<32x768xf32, #tpu.memory_space<vmem>>, %arg3: memref<1x1024xf32, #tpu.memory_space<vmem>>, %arg4: memref<32x32xf32, #tpu.memory_space<vmem>>) attributes {dimension_semantics = [#tpu.dimension_semantics<arbitrary>], iteration_bounds = array<i64: 1>, scalar_prefetch = 0 : i64, scratch_operands = 0 : i64, tpu.core_type = #tpu.core_type<tc>, window_params = [{pipeline_mode = #tpu.pipeline_mode<synchronous>, transform_indices = @transform_0, window_bounds = array<i64: 32, 32>}, {pipeline_mode = #tpu.pipeline_mode<synchronous>, transform_indices = @transform_1, window_bounds = array<i64: 32, 768>}, {pipeline_mode = #tpu.pipeline_mode<synchronous>, transform_indices = @transform_2, window_bounds = array<i64: 1, 1024>}, {pipeline_mode = #tpu.pipeline_mode<synchronous>, transform_indices = @transform_3, window_bounds = array<i64: 32, 32>}]} {
    %c0 = arith.constant 0 : index
    %c0_0 = arith.constant 0 : index
    %0 = vector.load %arg1[%c0, %c0_0] : memref<32x32xf32, #tpu.memory_space<vmem>>, vector<32x32xf32>
    %c0_1 = arith.constant 0 : index
    %c0_2 = arith.constant 0 : index
    %1 = vector.load %arg3[%c0_1, %c0_2] : memref<1x1024xf32, #tpu.memory_space<vmem>>, vector<1x32xf32>
    %c0_3 = arith.constant 0 : index
    %c128 = arith.constant 128 : index
    %2 = vector.load %arg3[%c0_3, %c128] : memref<1x1024xf32, #tpu.memory_space<vmem>>, vector<1x32xf32>
    %c0_4 = arith.constant 0 : index
    %c256 = arith.constant 256 : index
    %3 = vector.load %arg3[%c0_4, %c256] : memref<1x1024xf32, #tpu.memory_space<vmem>>, vector<1x96xf32>
    %c0_5 = arith.constant 0 : index
    %c384 = arith.constant 384 : index
    %4 = vector.load %arg3[%c0_5, %c384] : memref<1x1024xf32, #tpu.memory_space<vmem>>, vector<1x32xf32>
    %c0_6 = arith.constant 0 : index
    %c512 = arith.constant 512 : index
    %5 = vector.load %arg3[%c0_6, %c512] : memref<1x1024xf32, #tpu.memory_space<vmem>>, vector<1x32xf32>
    %c0_7 = arith.constant 0 : index
    %c640 = arith.constant 640 : index
    %6 = vector.load %arg3[%c0_7, %c640] : memref<1x1024xf32, #tpu.memory_space<vmem>>, vector<1x32xf32>
    %c0_8 = arith.constant 0 : index
    %c768 = arith.constant 768 : index
    %7 = vector.load %arg3[%c0_8, %c768] : memref<1x1024xf32, #tpu.memory_space<vmem>>, vector<1x64xf32>
    %c0_9 = arith.constant 0 : index
    %c896 = arith.constant 896 : index
    %8 = vector.load %arg3[%c0_9, %c896] : memref<1x1024xf32, #tpu.memory_space<vmem>>, vector<1x32xf32>
    %c0_10 = arith.constant 0 : index
    %c0_11 = arith.constant 0 : index
    %9 = vector.load %arg2[%c0_10, %c0_11] : memref<32x768xf32, #tpu.memory_space<vmem>>, vector<32x96xf32>
    %c0_12 = arith.constant 0 : index
    %c128_13 = arith.constant 128 : index
    %10 = vector.load %arg2[%c0_12, %c128_13] : memref<32x768xf32, #tpu.memory_space<vmem>>, vector<32x32xf32>
    %c0_14 = arith.constant 0 : index
    %c256_15 = arith.constant 256 : index
    %11 = vector.load %arg2[%c0_14, %c256_15] : memref<32x768xf32, #tpu.memory_space<vmem>>, vector<32x64xf32>
    %c0_16 = arith.constant 0 : index
    %c384_17 = arith.constant 384 : index
    %12 = vector.load %arg2[%c0_16, %c384_17] : memref<32x768xf32, #tpu.memory_space<vmem>>, vector<32x64xf32>
    %c0_18 = arith.constant 0 : index
    %c512_19 = arith.constant 512 : index
    %13 = vector.load %arg2[%c0_18, %c512_19] : memref<32x768xf32, #tpu.memory_space<vmem>>, vector<16x32xf32>
    %c16 = arith.constant 16 : index
    %c512_20 = arith.constant 512 : index
    %14 = vector.load %arg2[%c16, %c512_20] : memref<32x768xf32, #tpu.memory_space<vmem>>, vector<16x32xf32>
    %c0_21 = arith.constant 0 : index
    %c640_22 = arith.constant 640 : index
    %15 = vector.load %arg2[%c0_21, %c640_22] : memref<32x768xf32, #tpu.memory_space<vmem>>, vector<32x16xf32>
    %cst = arith.constant dense<0.000000e+00> : vector<32xf32>
    %16 = vector.multi_reduction <add>, %0, %cst [1] : vector<32x32xf32> to vector<32xf32>
    %17 = vector.shape_cast %16 : vector<32xf32> to vector<32x1xf32>
    %cst_23 = arith.constant 3.200000e+01 : f32
    %18 = vector.broadcast %cst_23 : f32 to vector<32x1xf32>
    %19 = arith.divf %17, %18 : vector<32x1xf32>
    %20 = vector.broadcast %19 : vector<32x1xf32> to vector<32x32xf32>
    %21 = arith.subf %0, %20 : vector<32x32xf32>
    %22 = arith.mulf %21, %21 : vector<32x32xf32>
    %cst_24 = arith.constant dense<0.000000e+00> : vector<32xf32>
    %23 = vector.multi_reduction <add>, %22, %cst_24 [1] : vector<32x32xf32> to vector<32xf32>
    %24 = vector.shape_cast %23 : vector<32xf32> to vector<32x1xf32>
    %cst_25 = arith.constant 3.200000e+01 : f32
    %25 = vector.broadcast %cst_25 : f32 to vector<32x1xf32>
    %26 = arith.divf %24, %25 : vector<32x1xf32>
    %27 = vector.broadcast %19 : vector<32x1xf32> to vector<32x32xf32>
    %28 = arith.subf %0, %27 : vector<32x32xf32>
    %cst_26 = arith.constant 9.99999974E-6 : f32
    %29 = vector.broadcast %cst_26 : f32 to vector<32x1xf32>
    %30 = arith.addf %26, %29 : vector<32x1xf32>
    %31 = math.rsqrt %30 : vector<32x1xf32>
    %32 = vector.broadcast %31 : vector<32x1xf32> to vector<32x32xf32>
    %33 = arith.mulf %28, %32 : vector<32x32xf32>
    %34 = vector.broadcast %1 : vector<1x32xf32> to vector<32x32xf32>
    %35 = arith.mulf %33, %34 : vector<32x32xf32>
    %36 = vector.broadcast %2 : vector<1x32xf32> to vector<32x32xf32>
    %37 = arith.addf %35, %36 : vector<32x32xf32>
    %cst_27 = arith.constant dense<0.000000e+00> : vector<32x96xf32>
    %38 = tpu.matmul %37, %9, %cst_27 {dimension_numbers = #tpu.dot_dimension_numbers<[1], [0], [0], [1], [0, 0, 1, 1], [], []>} : vector<32x32xf32>, vector<32x96xf32>, vector<32x96xf32> -> vector<32x96xf32>
    %39 = vector.broadcast %3 : vector<1x96xf32> to vector<32x96xf32>
    %40 = arith.addf %38, %39 : vector<32x96xf32>
    %41 = vector.extract_strided_slice %40 {offsets = [0, 0], sizes = [32, 32], strides = [1, 1]} : vector<32x96xf32> to vector<32x32xf32>
    %42 = vector.extract_strided_slice %40 {offsets = [0, 32], sizes = [32, 32], strides = [1, 1]} : vector<32x96xf32> to vector<32x32xf32>
    %43 = vector.extract_strided_slice %40 {offsets = [0, 64], sizes = [32, 32], strides = [1, 1]} : vector<32x96xf32> to vector<32x32xf32>
    %cst_28 = arith.constant dense<0.000000e+00> : vector<16x32xf32>
    %44 = tpu.matmul %13, %42, %cst_28 {dimension_numbers = #tpu.dot_dimension_numbers<[1], [0], [0], [1], [0, 0, 1, 1], [], []>} : vector<16x32xf32>, vector<32x32xf32>, vector<16x32xf32> -> vector<16x32xf32>
    %cst_29 = arith.constant dense<0.000000e+00> : vector<16x32xf32>
    %45 = tpu.matmul %14, %43, %cst_29 {dimension_numbers = #tpu.dot_dimension_numbers<[1], [0], [0], [1], [0, 0, 1, 1], [], []>} : vector<16x32xf32>, vector<32x32xf32>, vector<16x32xf32> -> vector<16x32xf32>
    %46 = vector.broadcast %4 : vector<1x32xf32> to vector<32x32xf32>
    %47 = arith.addf %0, %46 : vector<32x32xf32>
    %48 = vector.extract_strided_slice %41 {offsets = [0, 0], sizes = [32, 8], strides = [1, 1]} : vector<32x32xf32> to vector<32x8xf32>
    %49 = vector.extract_strided_slice %44 {offsets = [0, 0], sizes = [16, 8], strides = [1, 1]} : vector<16x32xf32> to vector<16x8xf32>
    %50 = vector.extract_strided_slice %45 {offsets = [0, 0], sizes = [16, 8], strides = [1, 1]} : vector<16x32xf32> to vector<16x8xf32>
    %cst_30 = arith.constant dense<0.000000e+00> : vector<32x16xf32>
    %51 = tpu.matmul %48, %49, %cst_30 {dimension_numbers = #tpu.dot_dimension_numbers<[1], [1], [0], [0], [0, 0, 1, 0], [], []>} : vector<32x8xf32>, vector<16x8xf32>, vector<32x16xf32> -> vector<32x16xf32>
    %52 = arith.addf %51, %15 : vector<32x16xf32>
    %cst_31 = arith.constant dense<0xFF800000> : vector<32xf32>
    %53 = vector.multi_reduction <maximumf>, %52, %cst_31 [1] : vector<32x16xf32> to vector<32xf32>
    %54 = vector.shape_cast %53 : vector<32xf32> to vector<32x1xf32>
    %55 = vector.broadcast %54 : vector<32x1xf32> to vector<32x16xf32>
    %56 = arith.subf %52, %55 : vector<32x16xf32>
    %57 = math.exp %56 : vector<32x16xf32>
    %cst_32 = arith.constant dense<0.000000e+00> : vector<32xf32>
    %58 = vector.multi_reduction <add>, %57, %cst_32 [1] : vector<32x16xf32> to vector<32xf32>
    %59 = vector.shape_cast %58 : vector<32xf32> to vector<32x1xf32>
    %60 = tpu.reciprocal %59 {approx = true} : vector<32x1xf32> -> vector<32x1xf32>
    %61 = vector.broadcast %60 : vector<32x1xf32> to vector<32x16xf32>
    %62 = arith.mulf %57, %61 : vector<32x16xf32>
    %cst_33 = arith.constant dense<0.000000e+00> : vector<32x8xf32>
    %63 = tpu.matmul %62, %50, %cst_33 {dimension_numbers = #tpu.dot_dimension_numbers<[1], [0], [0], [1], [0, 0, 1, 1], [], []>} : vector<32x16xf32>, vector<16x8xf32>, vector<32x8xf32> -> vector<32x8xf32>
    %64 = vector.extract_strided_slice %10 {offsets = [0, 0], sizes = [8, 32], strides = [1, 1]} : vector<32x32xf32> to vector<8x32xf32>
    %cst_34 = arith.constant dense<0.000000e+00> : vector<32x32xf32>
    %65 = tpu.matmul %63, %64, %cst_34 {dimension_numbers = #tpu.dot_dimension_numbers<[1], [0], [0], [1], [0, 0, 1, 1], [], []>} : vector<32x8xf32>, vector<8x32xf32>, vector<32x32xf32> -> vector<32x32xf32>
    %66 = arith.addf %47, %65 : vector<32x32xf32>
    %67 = vector.extract_strided_slice %41 {offsets = [0, 8], sizes = [32, 8], strides = [1, 1]} : vector<32x32xf32> to vector<32x8xf32>
    %68 = vector.extract_strided_slice %44 {offsets = [0, 8], sizes = [16, 8], strides = [1, 1]} : vector<16x32xf32> to vector<16x8xf32>
    %69 = vector.extract_strided_slice %45 {offsets = [0, 8], sizes = [16, 8], strides = [1, 1]} : vector<16x32xf32> to vector<16x8xf32>
    %cst_35 = arith.constant dense<0.000000e+00> : vector<32x16xf32>
    %70 = tpu.matmul %67, %68, %cst_35 {dimension_numbers = #tpu.dot_dimension_numbers<[1], [1], [0], [0], [0, 0, 1, 0], [], []>} : vector<32x8xf32>, vector<16x8xf32>, vector<32x16xf32> -> vector<32x16xf32>
    %71 = arith.addf %70, %15 : vector<32x16xf32>
    %cst_36 = arith.constant dense<0xFF800000> : vector<32xf32>
    %72 = vector.multi_reduction <maximumf>, %71, %cst_36 [1] : vector<32x16xf32> to vector<32xf32>
    %73 = vector.shape_cast %72 : vector<32xf32> to vector<32x1xf32>
    %74 = vector.broadcast %73 : vector<32x1xf32> to vector<32x16xf32>
    %75 = arith.subf %71, %74 : vector<32x16xf32>
    %76 = math.exp %75 : vector<32x16xf32>
    %cst_37 = arith.constant dense<0.000000e+00> : vector<32xf32>
    %77 = vector.multi_reduction <add>, %76, %cst_37 [1] : vector<32x16xf32> to vector<32xf32>
    %78 = vector.shape_cast %77 : vector<32xf32> to vector<32x1xf32>
    %79 = tpu.reciprocal %78 {approx = true} : vector<32x1xf32> -> vector<32x1xf32>
    %80 = vector.broadcast %79 : vector<32x1xf32> to vector<32x16xf32>
    %81 = arith.mulf %76, %80 : vector<32x16xf32>
    %cst_38 = arith.constant dense<0.000000e+00> : vector<32x8xf32>
    %82 = tpu.matmul %81, %69, %cst_38 {dimension_numbers = #tpu.dot_dimension_numbers<[1], [0], [0], [1], [0, 0, 1, 1], [], []>} : vector<32x16xf32>, vector<16x8xf32>, vector<32x8xf32> -> vector<32x8xf32>
    %83 = vector.extract_strided_slice %10 {offsets = [8, 0], sizes = [8, 32], strides = [1, 1]} : vector<32x32xf32> to vector<8x32xf32>
    %cst_39 = arith.constant dense<0.000000e+00> : vector<32x32xf32>
    %84 = tpu.matmul %82, %83, %cst_39 {dimension_numbers = #tpu.dot_dimension_numbers<[1], [0], [0], [1], [0, 0, 1, 1], [], []>} : vector<32x8xf32>, vector<8x32xf32>, vector<32x32xf32> -> vector<32x32xf32>
    %85 = arith.addf %66, %84 : vector<32x32xf32>
    %86 = vector.extract_strided_slice %41 {offsets = [0, 16], sizes = [32, 8], strides = [1, 1]} : vector<32x32xf32> to vector<32x8xf32>
    %87 = vector.extract_strided_slice %44 {offsets = [0, 16], sizes = [16, 8], strides = [1, 1]} : vector<16x32xf32> to vector<16x8xf32>
    %88 = vector.extract_strided_slice %45 {offsets = [0, 16], sizes = [16, 8], strides = [1, 1]} : vector<16x32xf32> to vector<16x8xf32>
    %cst_40 = arith.constant dense<0.000000e+00> : vector<32x16xf32>
    %89 = tpu.matmul %86, %87, %cst_40 {dimension_numbers = #tpu.dot_dimension_numbers<[1], [1], [0], [0], [0, 0, 1, 0], [], []>} : vector<32x8xf32>, vector<16x8xf32>, vector<32x16xf32> -> vector<32x16xf32>
    %90 = arith.addf %89, %15 : vector<32x16xf32>
    %cst_41 = arith.constant dense<0xFF800000> : vector<32xf32>
    %91 = vector.multi_reduction <maximumf>, %90, %cst_41 [1] : vector<32x16xf32> to vector<32xf32>
    %92 = vector.shape_cast %91 : vector<32xf32> to vector<32x1xf32>
    %93 = vector.broadcast %92 : vector<32x1xf32> to vector<32x16xf32>
    %94 = arith.subf %90, %93 : vector<32x16xf32>
    %95 = math.exp %94 : vector<32x16xf32>
    %cst_42 = arith.constant dense<0.000000e+00> : vector<32xf32>
    %96 = vector.multi_reduction <add>, %95, %cst_42 [1] : vector<32x16xf32> to vector<32xf32>
    %97 = vector.shape_cast %96 : vector<32xf32> to vector<32x1xf32>
    %98 = tpu.reciprocal %97 {approx = true} : vector<32x1xf32> -> vector<32x1xf32>
    %99 = vector.broadcast %98 : vector<32x1xf32> to vector<32x16xf32>
    %100 = arith.mulf %95, %99 : vector<32x16xf32>
    %cst_43 = arith.constant dense<0.000000e+00> : vector<32x8xf32>
    %101 = tpu.matmul %100, %88, %cst_43 {dimension_numbers = #tpu.dot_dimension_numbers<[1], [0], [0], [1], [0, 0, 1, 1], [], []>} : vector<32x16xf32>, vector<16x8xf32>, vector<32x8xf32> -> vector<32x8xf32>
    %102 = vector.extract_strided_slice %10 {offsets = [16, 0], sizes = [8, 32], strides = [1, 1]} : vector<32x32xf32> to vector<8x32xf32>
    %cst_44 = arith.constant dense<0.000000e+00> : vector<32x32xf32>
    %103 = tpu.matmul %101, %102, %cst_44 {dimension_numbers = #tpu.dot_dimension_numbers<[1], [0], [0], [1], [0, 0, 1, 1], [], []>} : vector<32x8xf32>, vector<8x32xf32>, vector<32x32xf32> -> vector<32x32xf32>
    %104 = arith.addf %85, %103 : vector<32x32xf32>
    %105 = vector.extract_strided_slice %41 {offsets = [0, 24], sizes = [32, 8], strides = [1, 1]} : vector<32x32xf32> to vector<32x8xf32>
    %106 = vector.extract_strided_slice %44 {offsets = [0, 24], sizes = [16, 8], strides = [1, 1]} : vector<16x32xf32> to vector<16x8xf32>
    %107 = vector.extract_strided_slice %45 {offsets = [0, 24], sizes = [16, 8], strides = [1, 1]} : vector<16x32xf32> to vector<16x8xf32>
    %cst_45 = arith.constant dense<0.000000e+00> : vector<32x16xf32>
    %108 = tpu.matmul %105, %106, %cst_45 {dimension_numbers = #tpu.dot_dimension_numbers<[1], [1], [0], [0], [0, 0, 1, 0], [], []>} : vector<32x8xf32>, vector<16x8xf32>, vector<32x16xf32> -> vector<32x16xf32>
    %109 = arith.addf %108, %15 : vector<32x16xf32>
    %cst_46 = arith.constant dense<0xFF800000> : vector<32xf32>
    %110 = vector.multi_reduction <maximumf>, %109, %cst_46 [1] : vector<32x16xf32> to vector<32xf32>
    %111 = vector.shape_cast %110 : vector<32xf32> to vector<32x1xf32>
    %112 = vector.broadcast %111 : vector<32x1xf32> to vector<32x16xf32>
    %113 = arith.subf %109, %112 : vector<32x16xf32>
    %114 = math.exp %113 : vector<32x16xf32>
    %cst_47 = arith.constant dense<0.000000e+00> : vector<32xf32>
    %115 = vector.multi_reduction <add>, %114, %cst_47 [1] : vector<32x16xf32> to vector<32xf32>
    %116 = vector.shape_cast %115 : vector<32xf32> to vector<32x1xf32>
    %117 = tpu.reciprocal %116 {approx = true} : vector<32x1xf32> -> vector<32x1xf32>
    %118 = vector.broadcast %117 : vector<32x1xf32> to vector<32x16xf32>
    %119 = arith.mulf %114, %118 : vector<32x16xf32>
    %cst_48 = arith.constant dense<0.000000e+00> : vector<32x8xf32>
    %120 = tpu.matmul %119, %107, %cst_48 {dimension_numbers = #tpu.dot_dimension_numbers<[1], [0], [0], [1], [0, 0, 1, 1], [], []>} : vector<32x16xf32>, vector<16x8xf32>, vector<32x8xf32> -> vector<32x8xf32>
    %121 = vector.extract_strided_slice %10 {offsets = [24, 0], sizes = [8, 32], strides = [1, 1]} : vector<32x32xf32> to vector<8x32xf32>
    %cst_49 = arith.constant dense<0.000000e+00> : vector<32x32xf32>
    %122 = tpu.matmul %120, %121, %cst_49 {dimension_numbers = #tpu.dot_dimension_numbers<[1], [0], [0], [1], [0, 0, 1, 1], [], []>} : vector<32x8xf32>, vector<8x32xf32>, vector<32x32xf32> -> vector<32x32xf32>
    %123 = arith.addf %104, %122 : vector<32x32xf32>
    %cst_50 = arith.constant dense<0.000000e+00> : vector<32xf32>
    %124 = vector.multi_reduction <add>, %123, %cst_50 [1] : vector<32x32xf32> to vector<32xf32>
    %125 = vector.shape_cast %124 : vector<32xf32> to vector<32x1xf32>
    %cst_51 = arith.constant 3.200000e+01 : f32
    %126 = vector.broadcast %cst_51 : f32 to vector<32x1xf32>
    %127 = arith.divf %125, %126 : vector<32x1xf32>
    %128 = vector.broadcast %127 : vector<32x1xf32> to vector<32x32xf32>
    %129 = arith.subf %123, %128 : vector<32x32xf32>
    %130 = arith.mulf %129, %129 : vector<32x32xf32>
    %cst_52 = arith.constant dense<0.000000e+00> : vector<32xf32>
    %131 = vector.multi_reduction <add>, %130, %cst_52 [1] : vector<32x32xf32> to vector<32xf32>
    %132 = vector.shape_cast %131 : vector<32xf32> to vector<32x1xf32>
    %cst_53 = arith.constant 3.200000e+01 : f32
    %133 = vector.broadcast %cst_53 : f32 to vector<32x1xf32>
    %134 = arith.divf %132, %133 : vector<32x1xf32>
    %135 = vector.broadcast %127 : vector<32x1xf32> to vector<32x32xf32>
    %136 = arith.subf %123, %135 : vector<32x32xf32>
    %cst_54 = arith.constant 9.99999974E-6 : f32
    %137 = vector.broadcast %cst_54 : f32 to vector<32x1xf32>
    %138 = arith.addf %134, %137 : vector<32x1xf32>
    %139 = math.rsqrt %138 : vector<32x1xf32>
    %140 = vector.broadcast %139 : vector<32x1xf32> to vector<32x32xf32>
    %141 = arith.mulf %136, %140 : vector<32x32xf32>
    %142 = vector.broadcast %5 : vector<1x32xf32> to vector<32x32xf32>
    %143 = arith.mulf %141, %142 : vector<32x32xf32>
    %144 = vector.broadcast %6 : vector<1x32xf32> to vector<32x32xf32>
    %145 = arith.addf %143, %144 : vector<32x32xf32>
    %cst_55 = arith.constant dense<0.000000e+00> : vector<32x64xf32>
    %146 = tpu.matmul %145, %11, %cst_55 {dimension_numbers = #tpu.dot_dimension_numbers<[1], [0], [0], [1], [0, 0, 1, 1], [], []>} : vector<32x32xf32>, vector<32x64xf32>, vector<32x64xf32> -> vector<32x64xf32>
    %147 = vector.broadcast %7 : vector<1x64xf32> to vector<32x64xf32>
    %148 = arith.addf %146, %147 : vector<32x64xf32>
    %cst_56 = arith.constant 5.000000e-01 : f32
    %149 = vector.broadcast %cst_56 : f32 to vector<32x64xf32>
    %150 = arith.mulf %149, %148 : vector<32x64xf32>
    %cst_57 = arith.constant 0.707106769 : f32
    %151 = vector.broadcast %cst_57 : f32 to vector<32x64xf32>
    %152 = arith.mulf %148, %151 : vector<32x64xf32>
    %153 = math.absf %152 : vector<32x64xf32>
    %cst_58 = arith.constant 0.327591091 : f32
    %154 = vector.broadcast %cst_58 : f32 to vector<32x64xf32>
    %155 = arith.mulf %154, %153 : vector<32x64xf32>
    %cst_59 = arith.constant 1.000000e+00 : f32
    %156 = vector.broadcast %cst_59 : f32 to vector<32x64xf32>
    %157 = arith.addf %156, %155 : vector<32x64xf32>
    %158 = tpu.reciprocal %157 {approx = true} : vector<32x64xf32> -> vector<32x64xf32>
    %159 = arith.mulf %157, %158 : vector<32x64xf32>
    %cst_60 = arith.constant 2.000000e+00 : f32
    %160 = vector.broadcast %cst_60 : f32 to vector<32x64xf32>
    %161 = arith.subf %160, %159 : vector<32x64xf32>
    %162 = arith.mulf %158, %161 : vector<32x64xf32>
    %cst_61 = arith.constant 1.06140542 : f32
    %163 = vector.broadcast %cst_61 : f32 to vector<32x64xf32>
    %164 = arith.mulf %162, %163 : vector<32x64xf32>
    %cst_62 = arith.constant -1.45315206 : f32
    %165 = vector.broadcast %cst_62 : f32 to vector<32x64xf32>
    %166 = arith.addf %165, %164 : vector<32x64xf32>
    %167 = arith.mulf %162, %166 : vector<32x64xf32>
    %cst_63 = arith.constant 1.42141378 : f32
    %168 = vector.broadcast %cst_63 : f32 to vector<32x64xf32>
    %169 = arith.addf %168, %167 : vector<32x64xf32>
    %170 = arith.mulf %162, %169 : vector<32x64xf32>
    %cst_64 = arith.constant -0.284496725 : f32
    %171 = vector.broadcast %cst_64 : f32 to vector<32x64xf32>
    %172 = arith.addf %171, %170 : vector<32x64xf32>
    %173 = arith.mulf %162, %172 : vector<32x64xf32>
    %cst_65 = arith.constant 0.254829586 : f32
    %174 = vector.broadcast %cst_65 : f32 to vector<32x64xf32>
    %175 = arith.addf %174, %173 : vector<32x64xf32>
    %176 = arith.mulf %162, %175 : vector<32x64xf32>
    %cst_66 = arith.constant 0.000000e+00 : f32
    %177 = vector.broadcast %cst_66 : f32 to vector<32x64xf32>
    %178 = arith.subf %177, %153 : vector<32x64xf32>
    %179 = arith.mulf %178, %153 : vector<32x64xf32>
    %180 = math.exp %179 : vector<32x64xf32>
    %181 = arith.mulf %176, %180 : vector<32x64xf32>
    %cst_67 = arith.constant 1.000000e+00 : f32
    %182 = vector.broadcast %cst_67 : f32 to vector<32x64xf32>
    %183 = arith.subf %182, %181 : vector<32x64xf32>
    %cst_68 = arith.constant 0.000000e+00 : f32
    %184 = vector.broadcast %cst_68 : f32 to vector<32x64xf32>
    %185 = arith.cmpf oge, %152, %184 : vector<32x64xf32>
    %cst_69 = arith.constant 0.000000e+00 : f32
    %186 = vector.broadcast %cst_69 : f32 to vector<32x64xf32>
    %187 = arith.subf %186, %183 : vector<32x64xf32>
    %188 = arith.select %185, %183, %187 : vector<32x64xi1>, vector<32x64xf32>
    %cst_70 = arith.constant 1.000000e+00 : f32
    %189 = vector.broadcast %cst_70 : f32 to vector<32x64xf32>
    %190 = arith.addf %189, %188 : vector<32x64xf32>
    %191 = arith.mulf %150, %190 : vector<32x64xf32>
    %cst_71 = arith.constant dense<0.000000e+00> : vector<32x32xf32>
    %192 = tpu.matmul %191, %12, %cst_71 {dimension_numbers = #tpu.dot_dimension_numbers<[1], [1], [0], [0], [0, 0, 1, 0], [], []>} : vector<32x64xf32>, vector<32x64xf32>, vector<32x32xf32> -> vector<32x32xf32>
    %193 = vector.broadcast %8 : vector<1x32xf32> to vector<32x32xf32>
    %194 = arith.addf %192, %193 : vector<32x32xf32>
    %195 = arith.addf %194, %123 : vector<32x32xf32>
    %c0_72 = arith.constant 0 : index
    %c0_73 = arith.constant 0 : index
    %196 = vector.load %arg4[%c0_72, %c0_73] : memref<32x32xf32, #tpu.memory_space<vmem>>, vector<32x32xf32>
    tpu.vector_store %arg4[%c0_72, %c0_73], %195 {strides = array<i32>} : memref<32x32xf32, #tpu.memory_space<vmem>>, vector<32x32xf32>,
    return
  }
  func.func @transform_0(%arg0: i32) -> (i32, i32) {
    %c0_i32 = arith.constant 0 : i32
    %c0_i32_0 = arith.constant 0 : i32
    %c0_i32_1 = arith.constant 0 : i32
    return %c0_i32, %c0_i32_0 : i32, i32
  }
  func.func @transform_1(%arg0: i32) -> (i32, i32) {
    %c0_i32 = arith.constant 0 : i32
    %c0_i32_0 = arith.constant 0 : i32
    %c0_i32_1 = arith.constant 0 : i32
    return %c0_i32, %c0_i32_0 : i32, i32
  }
  func.func @transform_2(%arg0: i32) -> (i32, i32) {
    %c0_i32 = arith.constant 0 : i32
    %c0_i32_0 = arith.constant 0 : i32
    %c0_i32_1 = arith.constant 0 : i32
    return %c0_i32, %c0_i32_0 : i32, i32
  }
  func.func @transform_3(%arg0: i32) -> (i32, i32) {
    %c0_i32 = arith.constant 0 : i32
    %c0_i32_0 = arith.constant 0 : i32
    %c0_i32_1 = arith.constant 0 : i32
    return %c0_i32, %c0_i32_0 : i32, i32
  }
}

</mosaic_0001>

<llo_original>
// kernel: tpu_custom_call.1
$region0: #{tpu_custom_call.1}
  #allocation0 [shape = 'u32[]', space=smem, size = 0x4, offset = 0x4, fixed_abs, tag = 'smem constant byte address 0x4 - core index']
  #allocation1 [shape = 'u32[72,128]{1,0:T(1,128)}', space=vmem, size = 0x9000, scoped, tag = 'internal scratch']
  %s0 = inlined_call_operand.hbm [shape: f32[32,32], index: 0, kind: input, shape index: {}]
  %s1 = inlined_call_operand.hbm [shape: f32[32,768], index: 1, kind: input, shape index: {}]
  %s2 = inlined_call_operand.hbm [shape: f32[1,1024], index: 2, kind: input, shape index: {}]
  %s3 = inlined_call_operand.hbm [shape: f32[32,32], index: 3, kind: output, shape index: {}]
  %s4 = sld [smem:[#allocation0]]
  $region34: #{tpu_custom_call.1} parent=0
    _
  %s6 = ssub.s32 1, %s4
  %s7 = scalar_select 0, %s6, %s4
  $region1: #{tpu_custom_call.1} parent=0
    #allocation2 [shape = 'u8[16384]{0}', space=vmem, size = 0x4000, scoped, tag = 'input window, operand 0, single buffered']
    #allocation3 [shape = 's32[1]{0}', space=sflag, size = 0x4, scoped, tag = 'scoped memory for tpu_custom_call.1']
    #allocation4 [shape = 's32[1]{0}', space=sflag, size = 0x4, scoped, tag = 'scoped memory for tpu_custom_call.1']
    #allocation5 [shape = 'u8[98304]{0}', space=vmem, size = 0x18000, scoped, tag = 'input window, operand 1, single buffered']
    #allocation6 [shape = 's32[1]{0}', space=sflag, size = 0x4, scoped, tag = 'scoped memory for tpu_custom_call.1']
    #allocation7 [shape = 'u8[4096]{0}', space=vmem, size = 0x1000, scoped, tag = 'input window, operand 2, single buffered']
    #allocation8 [shape = 'u8[16384]{0}', space=vmem, size = 0x4000, scoped, tag = 'output window, operand 0, single buffered']
    %8 = vsyncpa [#allocation3], 0
    %9 = vsyncpa [#allocation6], 0
    %10 = vsyncpa [#allocation4], 0
    // Predicated region
    $region2: #{tpu_custom_call.1} parent=1 // pred_check
      _
    $region3: #{tpu_custom_call.1} parent=1 // pred_check_branch
      %12 = sbr.rel (0) target = $region5
    $region4: #{tpu_custom_call.1} parent=1 // pred_region
      %14 = vsyncadd [#allocation3], 0
      %s15 = sshll.u32 %s0, 4
      %s16 = int_to_ptr.hbm [resolvable:$true] %s15
      %s17 = sshll.u32 [#allocation2], 4
      %s18 = int_to_ptr.vmem [resolvable:$true] %s17
      %23 = dma.hbm_to_vmem [thread:$0]  %s16, 512, %s18, [#allocation3], 128, 128, 8
    $region5: #{tpu_custom_call.1} parent=1 // pred_fallthru
      _
    // Predicated region
    $region6: #{tpu_custom_call.1} parent=1 // pred_check
      _
    $region7: #{tpu_custom_call.1} parent=1 // pred_check_branch
      %25 = sbr.rel (0) target = $region9
    $region8: #{tpu_custom_call.1} parent=1 // pred_region
      %27 = vsyncadd [#allocation6], 0
      %s28 = sshll.u32 %s1, 4
      %s29 = int_to_ptr.hbm [resolvable:$true] %s28
      %s30 = sshll.u32 [#allocation5], 4
      %s31 = int_to_ptr.vmem [resolvable:$true] %s30
      %36 = dma.hbm_to_vmem [thread:$0]  %s29, 3072, %s31, [#allocation6], 768, 768, 48
    $region9: #{tpu_custom_call.1} parent=1 // pred_fallthru
      _
    // Predicated region
    $region10: #{tpu_custom_call.1} parent=1 // pred_check
      _
    $region11: #{tpu_custom_call.1} parent=1 // pred_check_branch
      %38 = sbr.rel (0) target = $region13
    $region12: #{tpu_custom_call.1} parent=1 // pred_region
      %40 = vsyncadd [#allocation6], 0
      %s42 = sshll.u32 %s2, 4
      %s43 = int_to_ptr.hbm [resolvable:$true] %s42
      %s44 = sshll.u32 [#allocation7], 4
      %s45 = int_to_ptr.vmem [resolvable:$true] %s44
      %47 = dma.hbm_to_vmem [thread:$0]  %s43, 128, %s45, [#allocation6]
    $region13: #{tpu_custom_call.1} parent=1 // pred_fallthru
      _
    // Predicated region
    $region14: #{tpu_custom_call.1} parent=1 // pred_check
      _
    $region15: #{tpu_custom_call.1} parent=1 // pred_check_branch
      %49 = sbr.rel (0) target = $region17
    $region16: #{tpu_custom_call.1} parent=1 // pred_region
      %51 = dma.done [#allocation3], 512
    $region17: #{tpu_custom_call.1} parent=1 // pred_fallthru
      _
    // Predicated region
    $region18: #{tpu_custom_call.1} parent=1 // pred_check
      _
    $region19: #{tpu_custom_call.1} parent=1 // pred_check_branch
      %53 = sbr.rel (0) target = $region21
    $region20: #{tpu_custom_call.1} parent=1 // pred_region
      %55 = dma.done [#allocation6], 3072
    $region21: #{tpu_custom_call.1} parent=1 // pred_fallthru
      _
    // Predicated region
    $region22: #{tpu_custom_call.1} parent=1 // pred_check
      _
    $region23: #{tpu_custom_call.1} parent=1 // pred_check_branch
      %57 = sbr.rel (0) target = $region25
    $region24: #{tpu_custom_call.1} parent=1 // pred_region
      %59 = dma.done [#allocation6], 128
    $region25: #{tpu_custom_call.1} parent=1 // pred_fallthru
      _
    %v60 = vld [vmem:[#allocation2] sm:$0xff]
    %v61 = vld [vmem:[#allocation2 + $0x8] sm:$0xff]
    %v62 = vld [vmem:[#allocation2 + $0x10] sm:$0xff]
    %v63 = vld [vmem:[#allocation2 + $0x18] sm:$0xff]
    %v64 = vld [vmem:[#allocation7] sm:$0x1]
    %v65 = vld [vmem:[#allocation7 + $0x1] sm:$0x1]
    %v66 = vld [vmem:[#allocation7 + $0x2] sm:$0x1]
    %v67 = vld [vmem:[#allocation7 + $0x3] sm:$0x1]
    %v68 = vld [vmem:[#allocation7 + $0x4] sm:$0x1]
    %v69 = vld [vmem:[#allocation7 + $0x5] sm:$0x1]
    %v70 = vld [vmem:[#allocation7 + $0x6] sm:$0x1]
    %v71 = vld [vmem:[#allocation7 + $0x7] sm:$0x1]
    %v72 = vld [vmem:[#allocation5] sm:$0xff]
    %v73 = vld [vmem:[#allocation5 + $0x30] sm:$0xff]
    %v74 = vld [vmem:[#allocation5 + $0x60] sm:$0xff]
    %v75 = vld [vmem:[#allocation5 + $0x90] sm:$0xff]
    %v76 = vld [vmem:[#allocation5 + $0x8] sm:$0xff]
    %v77 = vld [vmem:[#allocation5 + $0x38] sm:$0xff]
    %v78 = vld [vmem:[#allocation5 + $0x68] sm:$0xff]
    %v79 = vld [vmem:[#allocation5 + $0x98] sm:$0xff]
    %v80 = vld [vmem:[#allocation5 + $0x10] sm:$0xff]
    %v81 = vld [vmem:[#allocation5 + $0x40] sm:$0xff]
    %v82 = vld [vmem:[#allocation5 + $0x70] sm:$0xff]
    %v83 = vld [vmem:[#allocation5 + $0xa0] sm:$0xff]
    %v84 = vld [vmem:[#allocation5 + $0x18] sm:$0xff]
    %v85 = vld [vmem:[#allocation5 + $0x48] sm:$0xff]
    %v86 = vld [vmem:[#allocation5 + $0x78] sm:$0xff]
    %v87 = vld [vmem:[#allocation5 + $0xa8] sm:$0xff]
    %v88 = vld [vmem:[#allocation5 + $0x20] sm:$0xff]
    %v89 = vld [vmem:[#allocation5 + $0x50] sm:$0xff]
    %v90 = vld [vmem:[#allocation5 + $0x80] sm:$0xff]
    %v91 = vld [vmem:[#allocation5 + $0xb0] sm:$0xff]
    %v92 = vld [vmem:[#allocation5 + $0x28] sm:$0xff]
    %v93 = vld [vmem:[#allocation5 + $0x58] sm:$0xff]
    %v94 = vld [vmem:[#allocation5 + $0x88] sm:$0xff]
    %v95 = vld [vmem:[#allocation5 + $0xb8] sm:$0xff]
    %vm96 = vcmask 261120
    %v97 = vsel %vm96, %v60, 0.0
    %98 = vadd.xlane.f32.xlu0 %v97
    %v99 = vpop.xlane.xlu0 %98
    %v100 = vsel %vm96, %v61, 0.0
    %101 = vadd.xlane.f32.xlu0 %v100
    %v102 = vpop.xlane.xlu0 %101
    %v103 = vsel %vm96, %v62, 0.0
    %104 = vadd.xlane.f32.xlu0 %v103
    %v105 = vpop.xlane.xlu0 %104
    %v106 = vsel %vm96, %v63, 0.0
    %107 = vadd.xlane.f32.xlu0 %v106
    %v108 = vpop.xlane.xlu0 %107
    %v109 = vrcp.pop 32.0
    %v110 = vmul.f32 32.0, %v109
    %v111 = vsub.f32 1.0, %v110
    %v112 = vmul.f32 %v109, %v111
    %v113 = vadd.f32 %v109, %v112
    %vm114 = vweird.f32 %v109
    %v115 = vsel %vm114, %v109, %v113
    %v116 = vmul.f32 %v99, %v115
    %v117 = vmul.f32 %v102, %v115
    %v118 = vmul.f32 %v105, %v115
    %v119 = vmul.f32 %v108, %v115
    %v120 = vsub.f32 %v60, %v116
    %v121 = vsub.f32 %v61, %v117
    %v122 = vsub.f32 %v62, %v118
    %v123 = vsub.f32 %v63, %v119
    %v124 = vmul.f32 %v120, %v120
    %v125 = vmul.f32 %v121, %v121
    %v126 = vmul.f32 %v122, %v122
    %v127 = vmul.f32 %v123, %v123
    %v128 = vsel %vm96, %v124, 0.0
    %129 = vadd.xlane.f32.xlu0 %v128
    %v130 = vpop.xlane.xlu0 %129
    %v131 = vsel %vm96, %v125, 0.0
    %132 = vadd.xlane.f32.xlu0 %v131
    %v133 = vpop.xlane.xlu0 %132
    %v134 = vsel %vm96, %v126, 0.0
    %135 = vadd.xlane.f32.xlu0 %v134
    %v136 = vpop.xlane.xlu0 %135
    %v137 = vsel %vm96, %v127, 0.0
    %138 = vadd.xlane.f32.xlu0 %v137
    %v139 = vpop.xlane.xlu0 %138
    %v140 = vmul.f32 %v130, %v115
    %v141 = vmul.f32 %v133, %v115
    %v142 = vmul.f32 %v136, %v115
    %v143 = vmul.f32 %v139, %v115
    %v144 = vadd.f32 %v140, 1e-05
    %v145 = vadd.f32 %v141, 1e-05
    %v146 = vadd.f32 %v142, 1e-05
    %v147 = vadd.f32 %v143, 1e-05
    %v148 = vrsqrt.pop %v144
    %v149 = vmul.f32 %v148, %v144
    %v150 = vmul.f32 %v149, %v148
    %v151 = vmul.f32 0.5, %v150
    %v152 = vsub.f32 1.5, %v151
    %v153 = vmul.f32 %v148, %v152
    %vm154 = vweird.f32 %v144
    %vm155 = vweird.f32 %v148
    %vm156 = vmor %vm154, %vm155
    %v157 = vsel %vm156, %v148, %v153
    %v158 = vrsqrt.pop %v145
    %v159 = vmul.f32 %v158, %v145
    %v160 = vmul.f32 %v159, %v158
    %v161 = vmul.f32 0.5, %v160
    %v162 = vsub.f32 1.5, %v161
    %v163 = vmul.f32 %v158, %v162
    %vm164 = vweird.f32 %v145
    %vm165 = vweird.f32 %v158
    %vm166 = vmor %vm164, %vm165
    %v167 = vsel %vm166, %v158, %v163
    %v168 = vrsqrt.pop %v146
    %v169 = vmul.f32 %v168, %v146
    %v170 = vmul.f32 %v169, %v168
    %v171 = vmul.f32 0.5, %v170
    %v172 = vsub.f32 1.5, %v171
    %v173 = vmul.f32 %v168, %v172
    %vm174 = vweird.f32 %v146
    %vm175 = vweird.f32 %v168
    %vm176 = vmor %vm174, %vm175
    %v177 = vsel %vm176, %v168, %v173
    %v178 = vrsqrt.pop %v147
    %v179 = vmul.f32 %v178, %v147
    %v180 = vmul.f32 %v179, %v178
    %v181 = vmul.f32 0.5, %v180
    %v182 = vsub.f32 1.5, %v181
    %v183 = vmul.f32 %v178, %v182
    %vm184 = vweird.f32 %v147
    %vm185 = vweird.f32 %v178
    %vm186 = vmor %vm184, %vm185
    %v187 = vsel %vm186, %v178, %v183
    %v188 = vmul.f32 %v120, %v157
    %v189 = vmul.f32 %v121, %v167
    %v190 = vmul.f32 %v122, %v177
    %v191 = vmul.f32 %v123, %v187
    %v193 = vperm.slane %v64, 0
    %v195 = vmul.f32 %v188, %v193
    %v196 = vmul.f32 %v189, %v193
    %v197 = vmul.f32 %v190, %v193
    %v198 = vmul.f32 %v191, %v193
    %v200 = vperm.slane %v65, 0
    %v202 = vadd.f32 %v195, %v200
    %v203 = vadd.f32 %v196, %v200
    %v204 = vadd.f32 %v197, %v200
    %v205 = vadd.f32 %v198, %v200
    %v207 = vperm.slane %v66, 0
    %v210 = vsel %vm96, %v202, 0
    %v213 = vsel %vm96, %v203, 0
    %v216 = vsel %vm96, %v204, 0
    %v219 = vsel %vm96, %v205, 0
    %221 = vmatpush.msra.mxu0 0.0
    %222 = vmatpush.msra.mxu0 0.0
    %223 = vmatpush.msra.mxu0 0.0
    %224 = vmatpush.msra.mxu0 0.0
    %225 = vmatpush.msra.mxu0 0.0
    %226 = vmatpush.msra.mxu0 0.0
    %227 = vmatpush.msra.mxu0 0.0
    %228 = vmatpush.msra.mxu0 0.0
    %229 = vmatpush.msra.mxu0 0.0
    %230 = vmatpush.msra.mxu0 0.0
    %231 = vmatpush.msra.mxu0 0.0
    %232 = vmatpush.msra.mxu0 0.0
    %233 = vmatpush.msra.mxu0 %v75
    %234 = vmatpush.msra.mxu0 %v74
    %235 = vmatpush.msra.mxu0 %v73
    %236 = vmatpush.msra.mxu0 %v72
    %237 = vmatmul.f32.gmra.mxu0 %v210
    %v238 = vpop.f32.mrf.mxu0
    %v239 = vadd.f32 %v207, %v238
    %240 = vmatmul.f32.gmra.mxu0 %v213
    %v241 = vpop.f32.mrf.mxu0
    %v242 = vadd.f32 %v207, %v241
    %243 = vmatmul.f32.gmra.mxu0 %v216
    %v244 = vpop.f32.mrf.mxu0
    %v245 = vadd.f32 %v207, %v244
    %246 = vmatmul.f32.gmra.mxu0 %v219
    %v247 = vpop.f32.mrf.mxu0
    %v248 = vadd.f32 %v207, %v247
    %249 = vdwg.mxu0
    %254 = vrot.lane.b32.xlu0 %v239, 96
    %v255 = vpop.permute.xlu0 %254
    %256 = vrot.lane.b32.xlu0 %v242, 96
    %v257 = vpop.permute.xlu0 %256
    %258 = vrot.lane.b32.xlu0 %v245, 96
    %v259 = vpop.permute.xlu0 %258
    %260 = vrot.lane.b32.xlu0 %v248, 96
    %v261 = vpop.permute.xlu0 %260
    %v267 = vsel %vm96, %v88, 0
    %v270 = vsel %vm96, %v89, 0
    %272 = vmatpush.msra.mxu0 0.0
    %273 = vmatpush.msra.mxu0 0.0
    %274 = vmatpush.msra.mxu0 0.0
    %275 = vmatpush.msra.mxu0 0.0
    %276 = vmatpush.msra.mxu0 0.0
    %277 = vmatpush.msra.mxu0 0.0
    %278 = vmatpush.msra.mxu0 0.0
    %279 = vmatpush.msra.mxu0 0.0
    %280 = vmatpush.msra.mxu0 0.0
    %281 = vmatpush.msra.mxu0 0.0
    %282 = vmatpush.msra.mxu0 0.0
    %283 = vmatpush.msra.mxu0 0.0
    %284 = vmatpush.msra.mxu0 %v261
    %285 = vmatpush.msra.mxu0 %v259
    %286 = vmatpush.msra.mxu0 %v257
    %287 = vmatpush.msra.mxu0 %v255
    %288 = vmatmul.f32.gmra.mxu0 %v267
    %v289 = vpop.f32.mrf.mxu0
    %v290 = vadd.f32 0.0, %v289
    %291 = vmatmul.f32.gmra.mxu0 %v270
    %v292 = vpop.f32.mrf.mxu0
    %v293 = vadd.f32 0.0, %v292
    %294 = vdwg.mxu0
    %295 = vrot.lane.b32.xlu0 %v239, 64
    %v296 = vpop.permute.xlu0 %295
    %297 = vrot.lane.b32.xlu0 %v242, 64
    %v298 = vpop.permute.xlu0 %297
    %299 = vrot.lane.b32.xlu0 %v245, 64
    %v300 = vpop.permute.xlu0 %299
    %301 = vrot.lane.b32.xlu0 %v248, 64
    %v302 = vpop.permute.xlu0 %301
    %v308 = vsel %vm96, %v90, 0
    %v311 = vsel %vm96, %v91, 0
    %313 = vmatpush.msra.mxu0 0.0
    %314 = vmatpush.msra.mxu0 0.0
    %315 = vmatpush.msra.mxu0 0.0
    %316 = vmatpush.msra.mxu0 0.0
    %317 = vmatpush.msra.mxu0 0.0
    %318 = vmatpush.msra.mxu0 0.0
    %319 = vmatpush.msra.mxu0 0.0
    %320 = vmatpush.msra.mxu0 0.0
    %321 = vmatpush.msra.mxu0 0.0
    %322 = vmatpush.msra.mxu0 0.0
    %323 = vmatpush.msra.mxu0 0.0
    %324 = vmatpush.msra.mxu0 0.0
    %325 = vmatpush.msra.mxu0 %v302
    %326 = vmatpush.msra.mxu0 %v300
    %327 = vmatpush.msra.mxu0 %v298
    %328 = vmatpush.msra.mxu0 %v296
    %329 = vmatmul.f32.gmra.mxu0 %v308
    %v330 = vpop.f32.mrf.mxu0
    %v331 = vadd.f32 0.0, %v330
    %332 = vmatmul.f32.gmra.mxu0 %v311
    %v333 = vpop.f32.mrf.mxu0
    %v334 = vadd.f32 0.0, %v333
    %335 = vdwg.mxu0
    %v337 = vperm.slane %v67, 0
    %v339 = vadd.f32 %v60, %v337
    %v340 = vadd.f32 %v61, %v337
    %v341 = vadd.f32 %v62, %v337
    %v342 = vadd.f32 %v63, %v337
    %vm343 = vcmask 64512
    %v344 = vsel %vm343, %v239, 0
    %v346 = vsel %vm343, %v242, 0
    %v348 = vsel %vm343, %v245, 0
    %v350 = vsel %vm343, %v248, 0
    %v353 = vsel %vm343, %v290, 0
    %v356 = vsel %vm343, %v293, 0
    %358 = vmatpush.xpose.msra.mxu0 0.0
    %359 = vmatpush.xpose.msra.mxu0 0.0
    %360 = vmatpush.xpose.msra.mxu0 0.0
    %361 = vmatpush.xpose.msra.mxu0 0.0
    %362 = vmatpush.xpose.msra.mxu0 0.0
    %363 = vmatpush.xpose.msra.mxu0 0.0
    %364 = vmatpush.xpose.msra.mxu0 0.0
    %365 = vmatpush.xpose.msra.mxu0 0.0
    %366 = vmatpush.xpose.msra.mxu0 0.0
    %367 = vmatpush.xpose.msra.mxu0 0.0
    %368 = vmatpush.xpose.msra.mxu0 0.0
    %369 = vmatpush.xpose.msra.mxu0 0.0
    %370 = vmatpush.xpose.msra.mxu0 0.0
    %371 = vmatpush.xpose.msra.mxu0 0.0
    %372 = vmatpush.xpose.msra.mxu0 %v356
    %373 = vmatpush.xpose.msra.mxu0 %v353
    %374 = vmatmul.f32.gmra.mxu0 %v344
    %v375 = vpop.f32.mrf.mxu0
    %v376 = vadd.f32 %v92, %v375
    %377 = vmatmul.f32.gmra.mxu0 %v346
    %v378 = vpop.f32.mrf.mxu0
    %v379 = vadd.f32 %v93, %v378
    %380 = vmatmul.f32.gmra.mxu0 %v348
    %v381 = vpop.f32.mrf.mxu0
    %v382 = vadd.f32 %v94, %v381
    %383 = vmatmul.f32.gmra.mxu0 %v350
    %v384 = vpop.f32.mrf.mxu0
    %v385 = vadd.f32 %v95, %v384
    %386 = vdwg.mxu0
    %vm387 = vcmask 130048
    %v388 = vsel %vm387, %v376, -inf
    %389 = vmax.xlane.f32.xlu0 %v388
    %v390 = vpop.xlane.xlu0 %389
    %v391 = vsel %vm387, %v379, -inf
    %392 = vmax.xlane.f32.xlu0 %v391
    %v393 = vpop.xlane.xlu0 %392
    %v394 = vsel %vm387, %v382, -inf
    %395 = vmax.xlane.f32.xlu0 %v394
    %v396 = vpop.xlane.xlu0 %395
    %v397 = vsel %vm387, %v385, -inf
    %398 = vmax.xlane.f32.xlu0 %v397
    %v399 = vpop.xlane.xlu0 %398
    %v400 = vsub.f32 %v376, %v390
    %v401 = vsub.f32 %v379, %v393
    %v402 = vsub.f32 %v382, %v396
    %v403 = vsub.f32 %v385, %v399
    %v404 = vmul.f32 %v400, 1.442695
    %v405 = vpow.pop %v404
    %v406 = vmul.f32 %v401, 1.442695
    %v407 = vpow.pop %v406
    %v408 = vmul.f32 %v402, 1.442695
    %v409 = vpow.pop %v408
    %v410 = vmul.f32 %v403, 1.442695
    %v411 = vpow.pop %v410
    %v412 = vsel %vm387, %v405, 0.0
    %413 = vadd.xlane.f32.xlu0 %v412
    %v414 = vpop.xlane.xlu0 %413
    %v415 = vsel %vm387, %v407, 0.0
    %416 = vadd.xlane.f32.xlu0 %v415
    %v417 = vpop.xlane.xlu0 %416
    %v418 = vsel %vm387, %v409, 0.0
    %419 = vadd.xlane.f32.xlu0 %v418
    %v420 = vpop.xlane.xlu0 %419
    %v421 = vsel %vm387, %v411, 0.0
    %422 = vadd.xlane.f32.xlu0 %v421
    %v423 = vpop.xlane.xlu0 %422
    %v424 = vrcp.pop %v414
    %v425 = vrcp.pop %v417
    %v426 = vrcp.pop %v420
    %v427 = vrcp.pop %v423
    %v428 = vmul.f32 %v405, %v424
    %v429 = vmul.f32 %v407, %v425
    %v430 = vmul.f32 %v409, %v426
    %v431 = vmul.f32 %v411, %v427
    %v433 = vsel %vm387, %v428, 0
    %v436 = vsel %vm387, %v429, 0
    %v439 = vsel %vm387, %v430, 0
    %v442 = vsel %vm387, %v431, 0
    %444 = vmatpush.msra.mxu0 0.0
    %445 = vmatpush.msra.mxu0 0.0
    %446 = vmatpush.msra.mxu0 0.0
    %447 = vmatpush.msra.mxu0 0.0
    %448 = vmatpush.msra.mxu0 0.0
    %449 = vmatpush.msra.mxu0 0.0
    %450 = vmatpush.msra.mxu0 0.0
    %451 = vmatpush.msra.mxu0 0.0
    %452 = vmatpush.msra.mxu0 0.0
    %453 = vmatpush.msra.mxu0 0.0
    %454 = vmatpush.msra.mxu0 0.0
    %455 = vmatpush.msra.mxu0 0.0
    %456 = vmatpush.msra.mxu0 0.0
    %457 = vmatpush.msra.mxu0 0.0
    %458 = vmatpush.msra.mxu0 %v334
    %459 = vmatpush.msra.mxu0 %v331
    %460 = vmatmul.f32.gmra.mxu0 %v433
    %v461 = vpop.f32.mrf.mxu0
    %v462 = vadd.f32 0.0, %v461
    %463 = vmatmul.f32.gmra.mxu0 %v436
    %v464 = vpop.f32.mrf.mxu0
    %v465 = vadd.f32 0.0, %v464
    %466 = vmatmul.f32.gmra.mxu0 %v439
    %v467 = vpop.f32.mrf.mxu0
    %v468 = vadd.f32 0.0, %v467
    %469 = vmatmul.f32.gmra.mxu0 %v442
    %v470 = vpop.f32.mrf.mxu0
    %v471 = vadd.f32 0.0, %v470
    %472 = vdwg.mxu0
    %v474 = vsel %vm343, %v462, 0
    %v477 = vsel %vm343, %v465, 0
    %v480 = vsel %vm343, %v468, 0
    %v483 = vsel %vm343, %v471, 0
    %485 = vmatpush.msra.mxu0 0.0
    %486 = vmatpush.msra.mxu0 0.0
    %487 = vmatpush.msra.mxu0 0.0
    %488 = vmatpush.msra.mxu0 0.0
    %489 = vmatpush.msra.mxu0 0.0
    %490 = vmatpush.msra.mxu0 0.0
    %491 = vmatpush.msra.mxu0 0.0
    %492 = vmatpush.msra.mxu0 0.0
    %493 = vmatpush.msra.mxu0 0.0
    %494 = vmatpush.msra.mxu0 0.0
    %495 = vmatpush.msra.mxu0 0.0
    %496 = vmatpush.msra.mxu0 0.0
    %497 = vmatpush.msra.mxu0 0.0
    %498 = vmatpush.msra.mxu0 0.0
    %499 = vmatpush.msra.mxu0 0.0
    %500 = vmatpush.msra.mxu0 %v76
    %501 = vmatmul.f32.gmra.mxu0 %v474
    %v502 = vpop.f32.mrf.mxu0
    %v503 = vadd.f32 0.0, %v502
    %504 = vmatmul.f32.gmra.mxu0 %v477
    %v505 = vpop.f32.mrf.mxu0
    %v506 = vadd.f32 0.0, %v505
    %507 = vmatmul.f32.gmra.mxu0 %v480
    %v508 = vpop.f32.mrf.mxu0
    %v509 = vadd.f32 0.0, %v508
    %510 = vmatmul.f32.gmra.mxu0 %v483
    %v511 = vpop.f32.mrf.mxu0
    %v512 = vadd.f32 0.0, %v511
    %513 = vdwg.mxu0
    %v514 = vadd.f32 %v339, %v503
    %v515 = vadd.f32 %v340, %v506
    %v516 = vadd.f32 %v341, %v509
    %v517 = vadd.f32 %v342, %v512
    %518 = vrot.lane.b32.xlu0 %v239, 120
    %v519 = vpop.permute.xlu0 %518
    %520 = vrot.lane.b32.xlu0 %v242, 120
    %v521 = vpop.permute.xlu0 %520
    %522 = vrot.lane.b32.xlu0 %v245, 120
    %v523 = vpop.permute.xlu0 %522
    %524 = vrot.lane.b32.xlu0 %v248, 120
    %v525 = vpop.permute.xlu0 %524
    %526 = vrot.lane.b32.xlu0 %v290, 120
    %v527 = vpop.permute.xlu0 %526
    %528 = vrot.lane.b32.xlu0 %v293, 120
    %v529 = vpop.permute.xlu0 %528
    %v530 = vsel %vm343, %v519, 0
    %v532 = vsel %vm343, %v521, 0
    %v534 = vsel %vm343, %v523, 0
    %v536 = vsel %vm343, %v525, 0
    %v538 = vsel %vm343, %v527, 0
    %v540 = vsel %vm343, %v529, 0
    %542 = vmatpush.xpose.msra.mxu0 0.0
    %543 = vmatpush.xpose.msra.mxu0 0.0
    %544 = vmatpush.xpose.msra.mxu0 0.0
    %545 = vmatpush.xpose.msra.mxu0 0.0
    %546 = vmatpush.xpose.msra.mxu0 0.0
    %547 = vmatpush.xpose.msra.mxu0 0.0
    %548 = vmatpush.xpose.msra.mxu0 0.0
    %549 = vmatpush.xpose.msra.mxu0 0.0
    %550 = vmatpush.xpose.msra.mxu0 0.0
    %551 = vmatpush.xpose.msra.mxu0 0.0
    %552 = vmatpush.xpose.msra.mxu0 0.0
    %553 = vmatpush.xpose.msra.mxu0 0.0
    %554 = vmatpush.xpose.msra.mxu0 0.0
    %555 = vmatpush.xpose.msra.mxu0 0.0
    %556 = vmatpush.xpose.msra.mxu0 %v540
    %557 = vmatpush.xpose.msra.mxu0 %v538
    %558 = vmatmul.f32.gmra.mxu0 %v530
    %v559 = vpop.f32.mrf.mxu0
    %v560 = vadd.f32 %v92, %v559
    %561 = vmatmul.f32.gmra.mxu0 %v532
    %v562 = vpop.f32.mrf.mxu0
    %v563 = vadd.f32 %v93, %v562
    %564 = vmatmul.f32.gmra.mxu0 %v534
    %v565 = vpop.f32.mrf.mxu0
    %v566 = vadd.f32 %v94, %v565
    %567 = vmatmul.f32.gmra.mxu0 %v536
    %v568 = vpop.f32.mrf.mxu0
    %v569 = vadd.f32 %v95, %v568
    %570 = vdwg.mxu0
    %v571 = vsel %vm387, %v560, -inf
    %572 = vmax.xlane.f32.xlu0 %v571
    %v573 = vpop.xlane.xlu0 %572
    %v574 = vsel %vm387, %v563, -inf
    %575 = vmax.xlane.f32.xlu0 %v574
    %v576 = vpop.xlane.xlu0 %575
    %v577 = vsel %vm387, %v566, -inf
    %578 = vmax.xlane.f32.xlu0 %v577
    %v579 = vpop.xlane.xlu0 %578
    %v580 = vsel %vm387, %v569, -inf
    %581 = vmax.xlane.f32.xlu0 %v580
    %v582 = vpop.xlane.xlu0 %581
    %v583 = vsub.f32 %v560, %v573
    %v584 = vsub.f32 %v563, %v576
    %v585 = vsub.f32 %v566, %v579
    %v586 = vsub.f32 %v569, %v582
    %v587 = vmul.f32 %v583, 1.442695
    %v588 = vpow.pop %v587
    %v589 = vmul.f32 %v584, 1.442695
    %v590 = vpow.pop %v589
    %v591 = vmul.f32 %v585, 1.442695
    %v592 = vpow.pop %v591
    %v593 = vmul.f32 %v586, 1.442695
    %v594 = vpow.pop %v593
    %v595 = vsel %vm387, %v588, 0.0
    %596 = vadd.xlane.f32.xlu0 %v595
    %v597 = vpop.xlane.xlu0 %596
    %v598 = vsel %vm387, %v590, 0.0
    %599 = vadd.xlane.f32.xlu0 %v598
    %v600 = vpop.xlane.xlu0 %599
    %v601 = vsel %vm387, %v592, 0.0
    %602 = vadd.xlane.f32.xlu0 %v601
    %v603 = vpop.xlane.xlu0 %602
    %v604 = vsel %vm387, %v594, 0.0
    %605 = vadd.xlane.f32.xlu0 %v604
    %v606 = vpop.xlane.xlu0 %605
    %v607 = vrcp.pop %v597
    %v608 = vrcp.pop %v600
    %v609 = vrcp.pop %v603
    %v610 = vrcp.pop %v606
    %v611 = vmul.f32 %v588, %v607
    %v612 = vmul.f32 %v590, %v608
    %v613 = vmul.f32 %v592, %v609
    %v614 = vmul.f32 %v594, %v610
    %617 = vrot.lane.b32.xlu0 %v331, 120
    %v618 = vpop.permute.xlu0 %617
    %619 = vrot.lane.b32.xlu0 %v334, 120
    %v620 = vpop.permute.xlu0 %619
    %v624 = vsel %vm387, %v611, 0
    %v627 = vsel %vm387, %v612, 0
    %v630 = vsel %vm387, %v613, 0
    %v633 = vsel %vm387, %v614, 0
    %635 = vmatpush.msra.mxu0 0.0
    %636 = vmatpush.msra.mxu0 0.0
    %637 = vmatpush.msra.mxu0 0.0
    %638 = vmatpush.msra.mxu0 0.0
    %639 = vmatpush.msra.mxu0 0.0
    %640 = vmatpush.msra.mxu0 0.0
    %641 = vmatpush.msra.mxu0 0.0
    %642 = vmatpush.msra.mxu0 0.0
    %643 = vmatpush.msra.mxu0 0.0
    %644 = vmatpush.msra.mxu0 0.0
    %645 = vmatpush.msra.mxu0 0.0
    %646 = vmatpush.msra.mxu0 0.0
    %647 = vmatpush.msra.mxu0 0.0
    %648 = vmatpush.msra.mxu0 0.0
    %649 = vmatpush.msra.mxu0 %v620
    %650 = vmatpush.msra.mxu0 %v618
    %651 = vmatmul.f32.gmra.mxu0 %v624
    %v652 = vpop.f32.mrf.mxu0
    %v653 = vadd.f32 0.0, %v652
    %654 = vmatmul.f32.gmra.mxu0 %v627
    %v655 = vpop.f32.mrf.mxu0
    %v656 = vadd.f32 0.0, %v655
    %657 = vmatmul.f32.gmra.mxu0 %v630
    %v658 = vpop.f32.mrf.mxu0
    %v659 = vadd.f32 0.0, %v658
    %660 = vmatmul.f32.gmra.mxu0 %v633
    %v661 = vpop.f32.mrf.mxu0
    %v662 = vadd.f32 0.0, %v661
    %663 = vdwg.mxu0
    %v665 = vsel %vm343, %v653, 0
    %v668 = vsel %vm343, %v656, 0
    %v671 = vsel %vm343, %v659, 0
    %v674 = vsel %vm343, %v662, 0
    %676 = vmatpush.msra.mxu0 0.0
    %677 = vmatpush.msra.mxu0 0.0
    %678 = vmatpush.msra.mxu0 0.0
    %679 = vmatpush.msra.mxu0 0.0
    %680 = vmatpush.msra.mxu0 0.0
    %681 = vmatpush.msra.mxu0 0.0
    %682 = vmatpush.msra.mxu0 0.0
    %683 = vmatpush.msra.mxu0 0.0
    %684 = vmatpush.msra.mxu0 0.0
    %685 = vmatpush.msra.mxu0 0.0
    %686 = vmatpush.msra.mxu0 0.0
    %687 = vmatpush.msra.mxu0 0.0
    %688 = vmatpush.msra.mxu0 0.0
    %689 = vmatpush.msra.mxu0 0.0
    %690 = vmatpush.msra.mxu0 0.0
    %691 = vmatpush.msra.mxu0 %v77
    %692 = vmatmul.f32.gmra.mxu0 %v665
    %v693 = vpop.f32.mrf.mxu0
    %v694 = vadd.f32 0.0, %v693
    %695 = vmatmul.f32.gmra.mxu0 %v668
    %v696 = vpop.f32.mrf.mxu0
    %v697 = vadd.f32 0.0, %v696
    %698 = vmatmul.f32.gmra.mxu0 %v671
    %v699 = vpop.f32.mrf.mxu0
    %v700 = vadd.f32 0.0, %v699
    %701 = vmatmul.f32.gmra.mxu0 %v674
    %v702 = vpop.f32.mrf.mxu0
    %v703 = vadd.f32 0.0, %v702
    %704 = vdwg.mxu0
    %v705 = vadd.f32 %v514, %v694
    %v706 = vadd.f32 %v515, %v697
    %v707 = vadd.f32 %v516, %v700
    %v708 = vadd.f32 %v517, %v703
    %709 = vrot.lane.b32.xlu0 %v239, 112
    %v710 = vpop.permute.xlu0 %709
    %711 = vrot.lane.b32.xlu0 %v242, 112
    %v712 = vpop.permute.xlu0 %711
    %713 = vrot.lane.b32.xlu0 %v245, 112
    %v714 = vpop.permute.xlu0 %713
    %715 = vrot.lane.b32.xlu0 %v248, 112
    %v716 = vpop.permute.xlu0 %715
    %717 = vrot.lane.b32.xlu0 %v290, 112
    %v718 = vpop.permute.xlu0 %717
    %719 = vrot.lane.b32.xlu0 %v293, 112
    %v720 = vpop.permute.xlu0 %719
    %v721 = vsel %vm343, %v710, 0
    %v723 = vsel %vm343, %v712, 0
    %v725 = vsel %vm343, %v714, 0
    %v727 = vsel %vm343, %v716, 0
    %v729 = vsel %vm343, %v718, 0
    %v731 = vsel %vm343, %v720, 0
    %733 = vmatpush.xpose.msra.mxu0 0.0
    %734 = vmatpush.xpose.msra.mxu0 0.0
    %735 = vmatpush.xpose.msra.mxu0 0.0
    %736 = vmatpush.xpose.msra.mxu0 0.0
    %737 = vmatpush.xpose.msra.mxu0 0.0
    %738 = vmatpush.xpose.msra.mxu0 0.0
    %739 = vmatpush.xpose.msra.mxu0 0.0
    %740 = vmatpush.xpose.msra.mxu0 0.0
    %741 = vmatpush.xpose.msra.mxu0 0.0
    %742 = vmatpush.xpose.msra.mxu0 0.0
    %743 = vmatpush.xpose.msra.mxu0 0.0
    %744 = vmatpush.xpose.msra.mxu0 0.0
    %745 = vmatpush.xpose.msra.mxu0 0.0
    %746 = vmatpush.xpose.msra.mxu0 0.0
    %747 = vmatpush.xpose.msra.mxu0 %v731
    %748 = vmatpush.xpose.msra.mxu0 %v729
    %749 = vmatmul.f32.gmra.mxu0 %v721
    %v750 = vpop.f32.mrf.mxu0
    %v751 = vadd.f32 %v92, %v750
    %752 = vmatmul.f32.gmra.mxu0 %v723
    %v753 = vpop.f32.mrf.mxu0
    %v754 = vadd.f32 %v93, %v753
    %755 = vmatmul.f32.gmra.mxu0 %v725
    %v756 = vpop.f32.mrf.mxu0
    %v757 = vadd.f32 %v94, %v756
    %758 = vmatmul.f32.gmra.mxu0 %v727
    %v759 = vpop.f32.mrf.mxu0
    %v760 = vadd.f32 %v95, %v759
    %761 = vdwg.mxu0
    %v762 = vsel %vm387, %v751, -inf
    %763 = vmax.xlane.f32.xlu0 %v762
    %v764 = vpop.xlane.xlu0 %763
    %v765 = vsel %vm387, %v754, -inf
    %766 = vmax.xlane.f32.xlu0 %v765
    %v767 = vpop.xlane.xlu0 %766
    %v768 = vsel %vm387, %v757, -inf
    %769 = vmax.xlane.f32.xlu0 %v768
    %v770 = vpop.xlane.xlu0 %769
    %v771 = vsel %vm387, %v760, -inf
    %772 = vmax.xlane.f32.xlu0 %v771
    %v773 = vpop.xlane.xlu0 %772
    %v774 = vsub.f32 %v751, %v764
    %v775 = vsub.f32 %v754, %v767
    %v776 = vsub.f32 %v757, %v770
    %v777 = vsub.f32 %v760, %v773
    %v778 = vmul.f32 %v774, 1.442695
    %v779 = vpow.pop %v778
    %v780 = vmul.f32 %v775, 1.442695
    %v781 = vpow.pop %v780
    %v782 = vmul.f32 %v776, 1.442695
    %v783 = vpow.pop %v782
    %v784 = vmul.f32 %v777, 1.442695
    %v785 = vpow.pop %v784
    %v786 = vsel %vm387, %v779, 0.0
    %787 = vadd.xlane.f32.xlu0 %v786
    %v788 = vpop.xlane.xlu0 %787
    %v789 = vsel %vm387, %v781, 0.0
    %790 = vadd.xlane.f32.xlu0 %v789
    %v791 = vpop.xlane.xlu0 %790
    %v792 = vsel %vm387, %v783, 0.0
    %793 = vadd.xlane.f32.xlu0 %v792
    %v794 = vpop.xlane.xlu0 %793
    %v795 = vsel %vm387, %v785, 0.0
    %796 = vadd.xlane.f32.xlu0 %v795
    %v797 = vpop.xlane.xlu0 %796
    %v798 = vrcp.pop %v788
    %v799 = vrcp.pop %v791
    %v800 = vrcp.pop %v794
    %v801 = vrcp.pop %v797
    %v802 = vmul.f32 %v779, %v798
    %v803 = vmul.f32 %v781, %v799
    %v804 = vmul.f32 %v783, %v800
    %v805 = vmul.f32 %v785, %v801
    %806 = vrot.lane.b32.xlu0 %v331, 112
    %v807 = vpop.permute.xlu0 %806
    %808 = vrot.lane.b32.xlu0 %v334, 112
    %v809 = vpop.permute.xlu0 %808
    %v813 = vsel %vm387, %v802, 0
    %v816 = vsel %vm387, %v803, 0
    %v819 = vsel %vm387, %v804, 0
    %v822 = vsel %vm387, %v805, 0
    %824 = vmatpush.msra.mxu0 0.0
    %825 = vmatpush.msra.mxu0 0.0
    %826 = vmatpush.msra.mxu0 0.0
    %827 = vmatpush.msra.mxu0 0.0
    %828 = vmatpush.msra.mxu0 0.0
    %829 = vmatpush.msra.mxu0 0.0
    %830 = vmatpush.msra.mxu0 0.0
    %831 = vmatpush.msra.mxu0 0.0
    %832 = vmatpush.msra.mxu0 0.0
    %833 = vmatpush.msra.mxu0 0.0
    %834 = vmatpush.msra.mxu0 0.0
    %835 = vmatpush.msra.mxu0 0.0
    %836 = vmatpush.msra.mxu0 0.0
    %837 = vmatpush.msra.mxu0 0.0
    %838 = vmatpush.msra.mxu0 %v809
    %839 = vmatpush.msra.mxu0 %v807
    %840 = vmatmul.f32.gmra.mxu0 %v813
    %v841 = vpop.f32.mrf.mxu0
    %v842 = vadd.f32 0.0, %v841
    %843 = vmatmul.f32.gmra.mxu0 %v816
    %v844 = vpop.f32.mrf.mxu0
    %v845 = vadd.f32 0.0, %v844
    %846 = vmatmul.f32.gmra.mxu0 %v819
    %v847 = vpop.f32.mrf.mxu0
    %v848 = vadd.f32 0.0, %v847
    %849 = vmatmul.f32.gmra.mxu0 %v822
    %v850 = vpop.f32.mrf.mxu0
    %v851 = vadd.f32 0.0, %v850
    %852 = vdwg.mxu0
    %v854 = vsel %vm343, %v842, 0
    %v857 = vsel %vm343, %v845, 0
    %v860 = vsel %vm343, %v848, 0
    %v863 = vsel %vm343, %v851, 0
    %865 = vmatpush.msra.mxu0 0.0
    %866 = vmatpush.msra.mxu0 0.0
    %867 = vmatpush.msra.mxu0 0.0
    %868 = vmatpush.msra.mxu0 0.0
    %869 = vmatpush.msra.mxu0 0.0
    %870 = vmatpush.msra.mxu0 0.0
    %871 = vmatpush.msra.mxu0 0.0
    %872 = vmatpush.msra.mxu0 0.0
    %873 = vmatpush.msra.mxu0 0.0
    %874 = vmatpush.msra.mxu0 0.0
    %875 = vmatpush.msra.mxu0 0.0
    %876 = vmatpush.msra.mxu0 0.0
    %877 = vmatpush.msra.mxu0 0.0
    %878 = vmatpush.msra.mxu0 0.0
    %879 = vmatpush.msra.mxu0 0.0
    %880 = vmatpush.msra.mxu0 %v78
    %881 = vmatmul.f32.gmra.mxu0 %v854
    %v882 = vpop.f32.mrf.mxu0
    %v883 = vadd.f32 0.0, %v882
    %884 = vmatmul.f32.gmra.mxu0 %v857
    %v885 = vpop.f32.mrf.mxu0
    %v886 = vadd.f32 0.0, %v885
    %887 = vmatmul.f32.gmra.mxu0 %v860
    %v888 = vpop.f32.mrf.mxu0
    %v889 = vadd.f32 0.0, %v888
    %890 = vmatmul.f32.gmra.mxu0 %v863
    %v891 = vpop.f32.mrf.mxu0
    %v892 = vadd.f32 0.0, %v891
    %893 = vdwg.mxu0
    %v894 = vadd.f32 %v705, %v883
    %v895 = vadd.f32 %v706, %v886
    %v896 = vadd.f32 %v707, %v889
    %v897 = vadd.f32 %v708, %v892
    %898 = vrot.lane.b32.xlu0 %v239, 104
    %v899 = vpop.permute.xlu0 %898
    %900 = vrot.lane.b32.xlu0 %v242, 104
    %v901 = vpop.permute.xlu0 %900
    %902 = vrot.lane.b32.xlu0 %v245, 104
    %v903 = vpop.permute.xlu0 %902
    %904 = vrot.lane.b32.xlu0 %v248, 104
    %v905 = vpop.permute.xlu0 %904
    %906 = vrot.lane.b32.xlu0 %v290, 104
    %v907 = vpop.permute.xlu0 %906
    %908 = vrot.lane.b32.xlu0 %v293, 104
    %v909 = vpop.permute.xlu0 %908
    %v910 = vsel %vm343, %v899, 0
    %v912 = vsel %vm343, %v901, 0
    %v914 = vsel %vm343, %v903, 0
    %v916 = vsel %vm343, %v905, 0
    %v918 = vsel %vm343, %v907, 0
    %v920 = vsel %vm343, %v909, 0
    %922 = vmatpush.xpose.msra.mxu0 0.0
    %923 = vmatpush.xpose.msra.mxu0 0.0
    %924 = vmatpush.xpose.msra.mxu0 0.0
    %925 = vmatpush.xpose.msra.mxu0 0.0
    %926 = vmatpush.xpose.msra.mxu0 0.0
    %927 = vmatpush.xpose.msra.mxu0 0.0
    %928 = vmatpush.xpose.msra.mxu0 0.0
    %929 = vmatpush.xpose.msra.mxu0 0.0
    %930 = vmatpush.xpose.msra.mxu0 0.0
    %931 = vmatpush.xpose.msra.mxu0 0.0
    %932 = vmatpush.xpose.msra.mxu0 0.0
    %933 = vmatpush.xpose.msra.mxu0 0.0
    %934 = vmatpush.xpose.msra.mxu0 0.0
    %935 = vmatpush.xpose.msra.mxu0 0.0
    %936 = vmatpush.xpose.msra.mxu0 %v920
    %937 = vmatpush.xpose.msra.mxu0 %v918
    %938 = vmatmul.f32.gmra.mxu0 %v910
    %v939 = vpop.f32.mrf.mxu0
    %v940 = vadd.f32 %v92, %v939
    %941 = vmatmul.f32.gmra.mxu0 %v912
    %v942 = vpop.f32.mrf.mxu0
    %v943 = vadd.f32 %v93, %v942
    %944 = vmatmul.f32.gmra.mxu0 %v914
    %v945 = vpop.f32.mrf.mxu0
    %v946 = vadd.f32 %v94, %v945
    %947 = vmatmul.f32.gmra.mxu0 %v916
    %v948 = vpop.f32.mrf.mxu0
    %v949 = vadd.f32 %v95, %v948
    %950 = vdwg.mxu0
    %v951 = vsel %vm387, %v940, -inf
    %952 = vmax.xlane.f32.xlu0 %v951
    %v953 = vpop.xlane.xlu0 %952
    %v954 = vsel %vm387, %v943, -inf
    %955 = vmax.xlane.f32.xlu0 %v954
    %v956 = vpop.xlane.xlu0 %955
    %v957 = vsel %vm387, %v946, -inf
    %958 = vmax.xlane.f32.xlu0 %v957
    %v959 = vpop.xlane.xlu0 %958
    %v960 = vsel %vm387, %v949, -inf
    %961 = vmax.xlane.f32.xlu0 %v960
    %v962 = vpop.xlane.xlu0 %961
    %v963 = vsub.f32 %v940, %v953
    %v964 = vsub.f32 %v943, %v956
    %v965 = vsub.f32 %v946, %v959
    %v966 = vsub.f32 %v949, %v962
    %v967 = vmul.f32 %v963, 1.442695
    %v968 = vpow.pop %v967
    %v969 = vmul.f32 %v964, 1.442695
    %v970 = vpow.pop %v969
    %v971 = vmul.f32 %v965, 1.442695
    %v972 = vpow.pop %v971
    %v973 = vmul.f32 %v966, 1.442695
    %v974 = vpow.pop %v973
    %v975 = vsel %vm387, %v968, 0.0
    %976 = vadd.xlane.f32.xlu0 %v975
    %v977 = vpop.xlane.xlu0 %976
    %v978 = vsel %vm387, %v970, 0.0
    %979 = vadd.xlane.f32.xlu0 %v978
    %v980 = vpop.xlane.xlu0 %979
    %v981 = vsel %vm387, %v972, 0.0
    %982 = vadd.xlane.f32.xlu0 %v981
    %v983 = vpop.xlane.xlu0 %982
    %v984 = vsel %vm387, %v974, 0.0
    %985 = vadd.xlane.f32.xlu0 %v984
    %v986 = vpop.xlane.xlu0 %985
    %v987 = vrcp.pop %v977
    %v988 = vrcp.pop %v980
    %v989 = vrcp.pop %v983
    %v990 = vrcp.pop %v986
    %v991 = vmul.f32 %v968, %v987
    %v992 = vmul.f32 %v970, %v988
    %v993 = vmul.f32 %v972, %v989
    %v994 = vmul.f32 %v974, %v990
    %995 = vrot.lane.b32.xlu0 %v331, 104
    %v996 = vpop.permute.xlu0 %995
    %997 = vrot.lane.b32.xlu0 %v334, 104
    %v998 = vpop.permute.xlu0 %997
    %v1002 = vsel %vm387, %v991, 0
    %v1005 = vsel %vm387, %v992, 0
    %v1008 = vsel %vm387, %v993, 0
    %v1011 = vsel %vm387, %v994, 0
    %1013 = vmatpush.msra.mxu0 0.0
    %1014 = vmatpush.msra.mxu0 0.0
    %1015 = vmatpush.msra.mxu0 0.0
    %1016 = vmatpush.msra.mxu0 0.0
    %1017 = vmatpush.msra.mxu0 0.0
    %1018 = vmatpush.msra.mxu0 0.0
    %1019 = vmatpush.msra.mxu0 0.0
    %1020 = vmatpush.msra.mxu0 0.0
    %1021 = vmatpush.msra.mxu0 0.0
    %1022 = vmatpush.msra.mxu0 0.0
    %1023 = vmatpush.msra.mxu0 0.0
    %1024 = vmatpush.msra.mxu0 0.0
    %1025 = vmatpush.msra.mxu0 0.0
    %1026 = vmatpush.msra.mxu0 0.0
    %1027 = vmatpush.msra.mxu0 %v998
    %1028 = vmatpush.msra.mxu0 %v996
    %1029 = vmatmul.f32.gmra.mxu0 %v1002
    %v1030 = vpop.f32.mrf.mxu0
    %v1031 = vadd.f32 0.0, %v1030
    %1032 = vmatmul.f32.gmra.mxu0 %v1005
    %v1033 = vpop.f32.mrf.mxu0
    %v1034 = vadd.f32 0.0, %v1033
    %1035 = vmatmul.f32.gmra.mxu0 %v1008
    %v1036 = vpop.f32.mrf.mxu0
    %v1037 = vadd.f32 0.0, %v1036
    %1038 = vmatmul.f32.gmra.mxu0 %v1011
    %v1039 = vpop.f32.mrf.mxu0
    %v1040 = vadd.f32 0.0, %v1039
    %1041 = vdwg.mxu0
    %v1043 = vsel %vm343, %v1031, 0
    %v1046 = vsel %vm343, %v1034, 0
    %v1049 = vsel %vm343, %v1037, 0
    %v1052 = vsel %vm343, %v1040, 0
    %1054 = vmatpush.msra.mxu0 0.0
    %1055 = vmatpush.msra.mxu0 0.0
    %1056 = vmatpush.msra.mxu0 0.0
    %1057 = vmatpush.msra.mxu0 0.0
    %1058 = vmatpush.msra.mxu0 0.0
    %1059 = vmatpush.msra.mxu0 0.0
    %1060 = vmatpush.msra.mxu0 0.0
    %1061 = vmatpush.msra.mxu0 0.0
    %1062 = vmatpush.msra.mxu0 0.0
    %1063 = vmatpush.msra.mxu0 0.0
    %1064 = vmatpush.msra.mxu0 0.0
    %1065 = vmatpush.msra.mxu0 0.0
    %1066 = vmatpush.msra.mxu0 0.0
    %1067 = vmatpush.msra.mxu0 0.0
    %1068 = vmatpush.msra.mxu0 0.0
    %1069 = vmatpush.msra.mxu0 %v79
    %1070 = vmatmul.f32.gmra.mxu0 %v1043
    %v1071 = vpop.f32.mrf.mxu0
    %v1072 = vadd.f32 0.0, %v1071
    %1073 = vmatmul.f32.gmra.mxu0 %v1046
    %v1074 = vpop.f32.mrf.mxu0
    %v1075 = vadd.f32 0.0, %v1074
    %1076 = vmatmul.f32.gmra.mxu0 %v1049
    %v1077 = vpop.f32.mrf.mxu0
    %v1078 = vadd.f32 0.0, %v1077
    %1079 = vmatmul.f32.gmra.mxu0 %v1052
    %v1080 = vpop.f32.mrf.mxu0
    %v1081 = vadd.f32 0.0, %v1080
    %1082 = vdwg.mxu0
    %v1083 = vadd.f32 %v894, %v1072
    %v1084 = vadd.f32 %v895, %v1075
    %v1085 = vadd.f32 %v896, %v1078
    %v1086 = vadd.f32 %v897, %v1081
    %v1087 = vsel %vm96, %v1083, 0.0
    %1088 = vadd.xlane.f32.xlu0 %v1087
    %v1089 = vpop.xlane.xlu0 %1088
    %v1090 = vsel %vm96, %v1084, 0.0
    %1091 = vadd.xlane.f32.xlu0 %v1090
    %v1092 = vpop.xlane.xlu0 %1091
    %v1093 = vsel %vm96, %v1085, 0.0
    %1094 = vadd.xlane.f32.xlu0 %v1093
    %v1095 = vpop.xlane.xlu0 %1094
    %v1096 = vsel %vm96, %v1086, 0.0
    %1097 = vadd.xlane.f32.xlu0 %v1096
    %v1098 = vpop.xlane.xlu0 %1097
    %v1099 = vmul.f32 %v1089, %v115
    %v1100 = vmul.f32 %v1092, %v115
    %v1101 = vmul.f32 %v1095, %v115
    %v1102 = vmul.f32 %v1098, %v115
    %v1103 = vsub.f32 %v1083, %v1099
    %v1104 = vsub.f32 %v1084, %v1100
    %v1105 = vsub.f32 %v1085, %v1101
    %v1106 = vsub.f32 %v1086, %v1102
    %v1107 = vmul.f32 %v1103, %v1103
    %v1108 = vmul.f32 %v1104, %v1104
    %v1109 = vmul.f32 %v1105, %v1105
    %v1110 = vmul.f32 %v1106, %v1106
    %v1111 = vsel %vm96, %v1107, 0.0
    %1112 = vadd.xlane.f32.xlu0 %v1111
    %v1113 = vpop.xlane.xlu0 %1112
    %v1114 = vsel %vm96, %v1108, 0.0
    %1115 = vadd.xlane.f32.xlu0 %v1114
    %v1116 = vpop.xlane.xlu0 %1115
    %v1117 = vsel %vm96, %v1109, 0.0
    %1118 = vadd.xlane.f32.xlu0 %v1117
    %v1119 = vpop.xlane.xlu0 %1118
    %v1120 = vsel %vm96, %v1110, 0.0
    %1121 = vadd.xlane.f32.xlu0 %v1120
    %v1122 = vpop.xlane.xlu0 %1121
    %v1123 = vmul.f32 %v1113, %v115
    %v1124 = vmul.f32 %v1116, %v115
    %v1125 = vmul.f32 %v1119, %v115
    %v1126 = vmul.f32 %v1122, %v115
    %v1127 = vadd.f32 %v1123, 1e-05
    %v1128 = vadd.f32 %v1124, 1e-05
    %v1129 = vadd.f32 %v1125, 1e-05
    %v1130 = vadd.f32 %v1126, 1e-05
    %v1131 = vrsqrt.pop %v1127
    %v1132 = vmul.f32 %v1131, %v1127
    %v1133 = vmul.f32 %v1132, %v1131
    %v1134 = vmul.f32 0.5, %v1133
    %v1135 = vsub.f32 1.5, %v1134
    %v1136 = vmul.f32 %v1131, %v1135
    %vm1137 = vweird.f32 %v1127
    %vm1138 = vweird.f32 %v1131
    %vm1139 = vmor %vm1137, %vm1138
    %v1140 = vsel %vm1139, %v1131, %v1136
    %v1141 = vrsqrt.pop %v1128
    %v1142 = vmul.f32 %v1141, %v1128
    %v1143 = vmul.f32 %v1142, %v1141
    %v1144 = vmul.f32 0.5, %v1143
    %v1145 = vsub.f32 1.5, %v1144
    %v1146 = vmul.f32 %v1141, %v1145
    %vm1147 = vweird.f32 %v1128
    %vm1148 = vweird.f32 %v1141
    %vm1149 = vmor %vm1147, %vm1148
    %v1150 = vsel %vm1149, %v1141, %v1146
    %v1151 = vrsqrt.pop %v1129
    %v1152 = vmul.f32 %v1151, %v1129
    %v1153 = vmul.f32 %v1152, %v1151
    %v1154 = vmul.f32 0.5, %v1153
    %v1155 = vsub.f32 1.5, %v1154
    %v1156 = vmul.f32 %v1151, %v1155
    %vm1157 = vweird.f32 %v1129
    %vm1158 = vweird.f32 %v1151
    %vm1159 = vmor %vm1157, %vm1158
    %v1160 = vsel %vm1159, %v1151, %v1156
    %v1161 = vrsqrt.pop %v1130
    %v1162 = vmul.f32 %v1161, %v1130
    %v1163 = vmul.f32 %v1162, %v1161
    %v1164 = vmul.f32 0.5, %v1163
    %v1165 = vsub.f32 1.5, %v1164
    %v1166 = vmul.f32 %v1161, %v1165
    %vm1167 = vweird.f32 %v1130
    %vm1168 = vweird.f32 %v1161
    %vm1169 = vmor %vm1167, %vm1168
    %v1170 = vsel %vm1169, %v1161, %v1166
    %v1171 = vmul.f32 %v1103, %v1140
    %v1172 = vmul.f32 %v1104, %v1150
    %v1173 = vmul.f32 %v1105, %v1160
    %v1174 = vmul.f32 %v1106, %v1170
    %v1176 = vperm.slane %v68, 0
    %v1178 = vmul.f32 %v1171, %v1176
    %v1179 = vmul.f32 %v1172, %v1176
    %v1180 = vmul.f32 %v1173, %v1176
    %v1181 = vmul.f32 %v1174, %v1176
    %v1183 = vperm.slane %v69, 0
    %v1185 = vadd.f32 %v1178, %v1183
    %v1186 = vadd.f32 %v1179, %v1183
    %v1187 = vadd.f32 %v1180, %v1183
    %v1188 = vadd.f32 %v1181, %v1183
    %v1190 = vperm.slane %v70, 0
    %v1193 = vsel %vm96, %v1185, 0
    %v1196 = vsel %vm96, %v1186, 0
    %v1199 = vsel %vm96, %v1187, 0
    %v1202 = vsel %vm96, %v1188, 0
    %1204 = vmatpush.msra.mxu0 0.0
    %1205 = vmatpush.msra.mxu0 0.0
    %1206 = vmatpush.msra.mxu0 0.0
    %1207 = vmatpush.msra.mxu0 0.0
    %1208 = vmatpush.msra.mxu0 0.0
    %1209 = vmatpush.msra.mxu0 0.0
    %1210 = vmatpush.msra.mxu0 0.0
    %1211 = vmatpush.msra.mxu0 0.0
    %1212 = vmatpush.msra.mxu0 0.0
    %1213 = vmatpush.msra.mxu0 0.0
    %1214 = vmatpush.msra.mxu0 0.0
    %1215 = vmatpush.msra.mxu0 0.0
    %1216 = vmatpush.msra.mxu0 %v83
    %1217 = vmatpush.msra.mxu0 %v82
    %1218 = vmatpush.msra.mxu0 %v81
    %1219 = vmatpush.msra.mxu0 %v80
    %1220 = vmatmul.f32.gmra.mxu0 %v1193
    %v1221 = vpop.f32.mrf.mxu0
    %v1222 = vadd.f32 %v1190, %v1221
    %1223 = vmatmul.f32.gmra.mxu0 %v1196
    %v1224 = vpop.f32.mrf.mxu0
    %v1225 = vadd.f32 %v1190, %v1224
    %1226 = vmatmul.f32.gmra.mxu0 %v1199
    %v1227 = vpop.f32.mrf.mxu0
    %v1228 = vadd.f32 %v1190, %v1227
    %1229 = vmatmul.f32.gmra.mxu0 %v1202
    %v1230 = vpop.f32.mrf.mxu0
    %v1231 = vadd.f32 %v1190, %v1230
    %1232 = vdwg.mxu0
    %v1233 = vmul.f32 %v1222, 0.5
    %v1234 = vmul.f32 %v1225, 0.5
    %v1235 = vmul.f32 %v1228, 0.5
    %v1236 = vmul.f32 %v1231, 0.5
    %v1237 = vmul.f32 %v1222, 0.70710677
    %v1238 = vmul.f32 %v1225, 0.70710677
    %v1239 = vmul.f32 %v1228, 0.70710677
    %v1240 = vmul.f32 %v1231, 0.70710677
    %v1241 = vand.u32 2147483647, %v1237
    %v1242 = vand.u32 2147483647, %v1238
    %v1243 = vand.u32 2147483647, %v1239
    %v1244 = vand.u32 2147483647, %v1240
    %v1245 = vmul.f32 %v1241, 0.3275911
    %v1246 = vmul.f32 %v1242, 0.3275911
    %v1247 = vmul.f32 %v1243, 0.3275911
    %v1248 = vmul.f32 %v1244, 0.3275911
    %v1249 = vadd.f32 %v1245, 1.0
    %v1250 = vadd.f32 %v1246, 1.0
    %v1251 = vadd.f32 %v1247, 1.0
    %v1252 = vadd.f32 %v1248, 1.0
    %v1253 = vrcp.pop %v1249
    %v1254 = vrcp.pop %v1250
    %v1255 = vrcp.pop %v1251
    %v1256 = vrcp.pop %v1252
    %v1257 = vmul.f32 %v1249, %v1253
    %v1258 = vmul.f32 %v1250, %v1254
    %v1259 = vmul.f32 %v1251, %v1255
    %v1260 = vmul.f32 %v1252, %v1256
    %v1261 = vsub.f32 2.0, %v1257
    %v1262 = vsub.f32 2.0, %v1258
    %v1263 = vsub.f32 2.0, %v1259
    %v1264 = vsub.f32 2.0, %v1260
    %v1265 = vmul.f32 %v1253, %v1261
    %v1266 = vmul.f32 %v1254, %v1262
    %v1267 = vmul.f32 %v1255, %v1263
    %v1268 = vmul.f32 %v1256, %v1264
    %v1269 = vmul.f32 %v1265, 1.0614054
    %v1270 = vmul.f32 %v1266, 1.0614054
    %v1271 = vmul.f32 %v1267, 1.0614054
    %v1272 = vmul.f32 %v1268, 1.0614054
    %v1273 = vadd.f32 %v1269, -1.4531521
    %v1274 = vadd.f32 %v1270, -1.4531521
    %v1275 = vadd.f32 %v1271, -1.4531521
    %v1276 = vadd.f32 %v1272, -1.4531521
    %v1277 = vmul.f32 %v1265, %v1273
    %v1278 = vmul.f32 %v1266, %v1274
    %v1279 = vmul.f32 %v1267, %v1275
    %v1280 = vmul.f32 %v1268, %v1276
    %v1281 = vadd.f32 %v1277, 1.4214138
    %v1282 = vadd.f32 %v1278, 1.4214138
    %v1283 = vadd.f32 %v1279, 1.4214138
    %v1284 = vadd.f32 %v1280, 1.4214138
    %v1285 = vmul.f32 %v1265, %v1281
    %v1286 = vmul.f32 %v1266, %v1282
    %v1287 = vmul.f32 %v1267, %v1283
    %v1288 = vmul.f32 %v1268, %v1284
    %v1289 = vadd.f32 %v1285, -0.28449672
    %v1290 = vadd.f32 %v1286, -0.28449672
    %v1291 = vadd.f32 %v1287, -0.28449672
    %v1292 = vadd.f32 %v1288, -0.28449672
    %v1293 = vmul.f32 %v1265, %v1289
    %v1294 = vmul.f32 %v1266, %v1290
    %v1295 = vmul.f32 %v1267, %v1291
    %v1296 = vmul.f32 %v1268, %v1292
    %v1297 = vadd.f32 %v1293, 0.2548296
    %v1298 = vadd.f32 %v1294, 0.2548296
    %v1299 = vadd.f32 %v1295, 0.2548296
    %v1300 = vadd.f32 %v1296, 0.2548296
    %v1301 = vmul.f32 %v1265, %v1297
    %v1302 = vmul.f32 %v1266, %v1298
    %v1303 = vmul.f32 %v1267, %v1299
    %v1304 = vmul.f32 %v1268, %v1300
    %v1305 = vsub.f32 0.0, %v1241
    %v1306 = vsub.f32 0.0, %v1242
    %v1307 = vsub.f32 0.0, %v1243
    %v1308 = vsub.f32 0.0, %v1244
    %v1309 = vmul.f32 %v1305, %v1241
    %v1310 = vmul.f32 %v1306, %v1242
    %v1311 = vmul.f32 %v1307, %v1243
    %v1312 = vmul.f32 %v1308, %v1244
    %v1313 = vmul.f32 %v1309, 1.442695
    %v1314 = vpow.pop %v1313
    %v1315 = vmul.f32 %v1310, 1.442695
    %v1316 = vpow.pop %v1315
    %v1317 = vmul.f32 %v1311, 1.442695
    %v1318 = vpow.pop %v1317
    %v1319 = vmul.f32 %v1312, 1.442695
    %v1320 = vpow.pop %v1319
    %v1321 = vmul.f32 %v1301, %v1314
    %v1322 = vmul.f32 %v1302, %v1316
    %v1323 = vmul.f32 %v1303, %v1318
    %v1324 = vmul.f32 %v1304, %v1320
    %v1325 = vsub.f32 1.0, %v1321
    %v1326 = vsub.f32 1.0, %v1322
    %v1327 = vsub.f32 1.0, %v1323
    %v1328 = vsub.f32 1.0, %v1324
    %vm1329 = vcmp.ge.f32.partialorder %v1237, 0.0
    %vm1330 = vcmp.ge.f32.partialorder %v1238, 0.0
    %vm1331 = vcmp.ge.f32.partialorder %v1239, 0.0
    %vm1332 = vcmp.ge.f32.partialorder %v1240, 0.0
    %v1333 = vsub.f32 0.0, %v1325
    %v1334 = vsub.f32 0.0, %v1326
    %v1335 = vsub.f32 0.0, %v1327
    %v1336 = vsub.f32 0.0, %v1328
    %v1337 = vsel %vm1329, %v1325, %v1333
    %v1338 = vsel %vm1330, %v1326, %v1334
    %v1339 = vsel %vm1331, %v1327, %v1335
    %v1340 = vsel %vm1332, %v1328, %v1336
    %v1341 = vadd.f32 %v1337, 1.0
    %v1342 = vadd.f32 %v1338, 1.0
    %v1343 = vadd.f32 %v1339, 1.0
    %v1344 = vadd.f32 %v1340, 1.0
    %v1345 = vmul.f32 %v1233, %v1341
    %v1346 = vmul.f32 %v1234, %v1342
    %v1347 = vmul.f32 %v1235, %v1343
    %v1348 = vmul.f32 %v1236, %v1344
    %v1350 = vperm.slane %v71, 0
    %vm1352 = vcmask 523264
    %v1354 = vsel %vm1352, %v1345, 0
    %v1357 = vsel %vm1352, %v1346, 0
    %v1360 = vsel %vm1352, %v1347, 0
    %v1363 = vsel %vm1352, %v1348, 0
    %v1366 = vsel %vm1352, %v84, 0
    %v1369 = vsel %vm1352, %v85, 0
    %v1372 = vsel %vm1352, %v86, 0
    %v1375 = vsel %vm1352, %v87, 0
    %1377 = vmatpush.xpose.msra.mxu0 0.0
    %1378 = vmatpush.xpose.msra.mxu0 0.0
    %1379 = vmatpush.xpose.msra.mxu0 0.0
    %1380 = vmatpush.xpose.msra.mxu0 0.0
    %1381 = vmatpush.xpose.msra.mxu0 0.0
    %1382 = vmatpush.xpose.msra.mxu0 0.0
    %1383 = vmatpush.xpose.msra.mxu0 0.0
    %1384 = vmatpush.xpose.msra.mxu0 0.0
    %1385 = vmatpush.xpose.msra.mxu0 0.0
    %1386 = vmatpush.xpose.msra.mxu0 0.0
    %1387 = vmatpush.xpose.msra.mxu0 0.0
    %1388 = vmatpush.xpose.msra.mxu0 0.0
    %1389 = vmatpush.xpose.msra.mxu0 %v1375
    %1390 = vmatpush.xpose.msra.mxu0 %v1372
    %1391 = vmatpush.xpose.msra.mxu0 %v1369
    %1392 = vmatpush.xpose.msra.mxu0 %v1366
    %1393 = vmatmul.f32.gmra.mxu0 %v1354
    %v1394 = vpop.f32.mrf.mxu0
    %v1395 = vadd.f32 %v1350, %v1394
    %1396 = vmatmul.f32.gmra.mxu0 %v1357
    %v1397 = vpop.f32.mrf.mxu0
    %v1398 = vadd.f32 %v1350, %v1397
    %1399 = vmatmul.f32.gmra.mxu0 %v1360
    %v1400 = vpop.f32.mrf.mxu0
    %v1401 = vadd.f32 %v1350, %v1400
    %1402 = vmatmul.f32.gmra.mxu0 %v1363
    %v1403 = vpop.f32.mrf.mxu0
    %v1404 = vadd.f32 %v1350, %v1403
    %1405 = vdwg.mxu0
    %v1406 = vadd.f32 %v1395, %v1083
    %v1407 = vadd.f32 %v1398, %v1084
    %v1408 = vadd.f32 %v1401, %v1085
    %v1409 = vadd.f32 %v1404, %v1086
    %1410 = vst.msk [vmem:[#allocation8] sm:$0xff] %vm96, %v1406
    %1411 = vst.msk [vmem:[#allocation8 + $0x8] sm:$0xff] %vm96, %v1407
    %1412 = vst.msk [vmem:[#allocation8 + $0x10] sm:$0xff] %vm96, %v1408
    %1413 = vst.msk [vmem:[#allocation8 + $0x18] sm:$0xff] %vm96, %v1409
    // Predicated region
    $region26: #{tpu_custom_call.1} parent=1 // pred_check
      _
    $region27: #{tpu_custom_call.1} parent=1 // pred_check_branch
      %1415 = sbr.rel (0) target = $region29
    $region28: #{tpu_custom_call.1} parent=1 // pred_region
      %1417 = vsyncadd [#allocation4], 0
      %s1418 = sshll.u32 [#allocation8], 4
      %s1419 = int_to_ptr.vmem [resolvable:$true] %s1418
      %s1420 = sshll.u32 %s3, 4
      %s1421 = int_to_ptr.hbm [resolvable:$true] %s1420
      %1426 = dma.vmem_to_hbm [thread:$0]  %s1419, 512, %s1421, [#allocation4], 128, 128, 8
    $region29: #{tpu_custom_call.1} parent=1 // pred_fallthru
      _
    // Predicated region
    $region30: #{tpu_custom_call.1} parent=1 // pred_check
      _
    $region31: #{tpu_custom_call.1} parent=1 // pred_check_branch
      %1428 = sbr.rel (0) target = $region33
    $region32: #{tpu_custom_call.1} parent=1 // pred_region
      %1430 = dma.done [#allocation4], 512
    $region33: #{tpu_custom_call.1} parent=1 // pred_fallthru
      _
    %1431 = vsyncpa [#allocation3], 1
    %1432 = vsyncpa [#allocation6], 1
    %1433 = vsyncpa [#allocation4], 1

</llo_original>
